<compile_context>
chip_gen: v5e
topology: v5e:2x2
jax: 0.10.0
libtpu: 0.0.40
codegen_flags: <defaults>
</compile_context>

<pallas_src>
import math

import jax
import jax.numpy as jnp
from jax.experimental import pallas as pl
from jax.experimental.pallas import tpu as pltpu


def _cdiv(a, b):
    return (a + b - 1) // b


# --------------------------------------------------------------------------- kernels

def _u1_kernel(feat_ref, r_ref, u1f_ref, u1b_ref):
    """U1 row tile = feature_tile @ R  (== GraphConvolution's support = W(input)).

    Emits both f32 (final merge) and bf16 (hop-1 MXU operand) copies so downstream
    kernels never re-cast the full array inside the grid loop.
    """
    u1 = jnp.dot(feat_ref[...], r_ref[...], preferred_element_type=jnp.float32)
    u1f_ref[...] = u1
    u1b_ref[...] = u1.astype(jnp.bfloat16)


def _hop1_kernel(wb_ref, a_ref, u1b_ref, m_ref, u2f_ref, u2b_ref, acc_ref):
    """Per (row, col) tile: merge adjacency layers, cache M (bf16), accumulate U2.

    wb_ref : SMEM (L,)          merge weights (int8-packing scale already folded in)
    a_ref  : VMEM (L, TM, TC)   int8 (or bf16) tile of the multiplex adjacency stack
    u1b_ref: VMEM (Np, Dp)      bf16 U1, resident across the whole grid
    m_ref  : VMEM (TM, TC)      bf16 merged-adjacency cache tile (output)
    u2f_ref: VMEM (TM, Dp)      f32 U2 rows (output, written at the last column)
    u2b_ref: VMEM (TM, Dp)      bf16 U2 rows (output, written at the last column)
    acc_ref: VMEM (TM, Dp)      f32 scratch accumulator over the column axis
    """
    c = pl.program_id(1)
    n_layers = a_ref.shape[0]
    tc = a_ref.shape[2]

    @pl.when(c == 0)
    def _():
        acc_ref[...] = jnp.zeros_like(acc_ref)

    # Merge the L adjacency layers in f32 on the VPU (static unroll; L = 4).
    # (On v6e/v7x this could run natively in bf16; f32 keeps v5e's VPU happy.)
    m = wb_ref[0] * a_ref[0].astype(jnp.float32)
    for k in range(1, n_layers):
        m = m + wb_ref[k] * a_ref[k].astype(jnp.float32)
    m_bf16 = m.astype(jnp.bfloat16)
    m_ref[...] = m_bf16

    col0 = pl.multiple_of(c * tc, 128)
    acc_ref[...] += jnp.dot(m_bf16, u1b_ref[pl.ds(col0, tc), :],
                            preferred_element_type=jnp.float32)

    @pl.when(c == pl.num_programs(1) - 1)
    def _():
        u2f_ref[...] = acc_ref[...]
        u2b_ref[...] = acc_ref[...].astype(jnp.bfloat16)


def _hop2_kernel(wa_ref, m_ref, u2b_ref, u1f_ref, u2f_ref, out_ref, acc_ref):
    """Per (row, col) tile: accumulate U3 = M @ U2, then the final weighted hop merge.

    wa_ref : SMEM (3,)      hop merge weights
    m_ref  : VMEM (TM, TC)  bf16 cached merged-adjacency tile
    u2b_ref: VMEM (Np, Dp)  bf16 U2, resident across the whole grid
    u1f_ref: VMEM (TM, Dp)  f32 U1 rows of this row tile
    u2f_ref: VMEM (TM, Dp)  f32 U2 rows of this row tile
    out_ref: VMEM (TM, Dp)  f32 output rows (written at the last column)
    acc_ref: VMEM (TM, Dp)  f32 scratch accumulator over the column axis
    """
    c = pl.program_id(1)
    tc = m_ref.shape[1]

    @pl.when(c == 0)
    def _():
        acc_ref[...] = jnp.zeros_like(acc_ref)

    col0 = pl.multiple_of(c * tc, 128)
    acc_ref[...] += jnp.dot(m_ref[...], u2b_ref[pl.ds(col0, tc), :],
                            preferred_element_type=jnp.float32)

    @pl.when(c == pl.num_programs(1) - 1)
    def _():
        out_ref[...] = (wa_ref[0] * u1f_ref[...] + wa_ref[1] * u2f_ref[...]
                        + wa_ref[2] * acc_ref[...])


# --------------------------------------------------------------------------- setup

def prepare_inputs(A, feature, R, *, tm=256, tc=None, lane_pad=128):
    """One-time, per-model packing.  Call OUTSIDE the per-forward jit path.

    * A is stored at 1 byte/element (int8, entries {0,1,2}; the 0.5 scale is folded
      into weight_b inside fame_forward) when its entries are half-integers — this
      halves the dominant HBM stream vs bf16.  Otherwise it falls back to bf16.
    * Rows/cols are padded to a multiple of both tile sizes (skipped when aligned);
      the embedding width is padded to a lane-dense multiple of 128.
    """
    n_layers, N, _ = A.shape
    F = feature.shape[1]
    dim = R.shape[1]

    if tc is None:
        n_pad = _cdiv(N, tm) * tm
        tc = n_pad                         # single column tile => lowest HBM traffic
    else:
        step = math.lcm(tm, tc)
        n_pad = _cdiv(N, step) * step
    d_pad = _cdiv(dim, lane_pad) * lane_pad

    A2 = A.astype(jnp.float32) * 2.0
    A2r = jnp.round(A2)
    if bool(jnp.all(A2r == A2)) and float(jnp.max(jnp.abs(A2r))) <= 127.0:
        a_scale = 0.5                      # folded into weight_b in fame_forward
        A_store = A2r.astype(jnp.int8)
    else:
        # TODO(synk): general-valued adjacency keeps 2 B/elem (bf16) storage.
        a_scale = 1.0
        A_store = A.astype(jnp.bfloat16)

    if n_pad == N:
        A_packed = A_store                 # aligned: pass through untouched
    else:
        A_packed = jnp.zeros((n_layers, n_pad, n_pad), A_store.dtype)
        A_packed = A_packed.at[:, :N, :N].set(A_store)

    feat_p = jnp.zeros((n_pad, F), jnp.float32).at[:N, :].set(feature.astype(jnp.float32))
    R_p = jnp.zeros((F, d_pad), jnp.float32).at[:, :dim].set(R.astype(jnp.float32))

    return dict(A=A_packed, a_scale=a_scale, feature=feat_p, R=R_p, tm=tm, tc=tc)


def _vmem_limit(nbytes):
    # 50% headroom over the double-buffered working set + 2 MiB internal scratch,
    # clamped to the smallest physical VMEM (v7x: 64 MiB per TensorCore).
    return int(min(max(int(nbytes * 1.5) + (2 << 20), 4 << 20), 64 << 20))


# --------------------------------------------------------------------------- forward

def fame_forward(weight_b, weight_a, A_packed, feat_p, R_p, *,
                 n, dim, a_scale, tm, tc):
    """weight_b: (L,1), weight_a: (3,1); A_packed/feat_p/R_p from prepare_inputs."""
    n_layers, n_pad, _ = A_packed.shape
    F = feat_p.shape[1]
    d_pad = R_p.shape[1]

    assert tm % 32 == 0 and tc % 128 == 0, "tm must be a multiple of 32, tc of 128"
    assert n_pad % tm == 0 and n_pad % tc == 0
    rows, cols = n_pad // tm, n_pad // tc
    a_bytes = A_packed.dtype.itemsize

    wb = (weight_b.reshape(-1) * a_scale).astype(jnp.float32)   # (L,) -> SMEM
    wa = weight_a.reshape(-1).astype(jnp.float32)               # (3,) -> SMEM

    # ---- U1 = feature @ R (row-tiled; emits f32 + bf16 copies once) ---------------
    u1_vmem = _vmem_limit(2 * tm * F * 4 + 2 * F * d_pad * 4
                          + 2 * tm * d_pad * (4 + 2) + 2 * tm * d_pad * 4)
    u1_cost = pl.CostEstimate(
        flops=2 * n_pad * F * d_pad, transcendentals=0,
        bytes_accessed=n_pad * F * 4 + F * d_pad * 4 + n_pad * d_pad * (4 + 2))
    u1f, u1b = pl.pallas_call(
        _u1_kernel,
        grid=(rows,),
        in_specs=[pl.BlockSpec((tm, F), lambda r: (r, 0)),
                  pl.BlockSpec((F, d_pad), lambda r: (0, 0))],
        out_specs=[pl.BlockSpec((tm, d_pad), lambda r: (r, 0)),
                   pl.BlockSpec((tm, d_pad), lambda r: (r, 0))],
        out_shape=(jax.ShapeDtypeStruct((n_pad, d_pad), jnp.float32),
                   jax.ShapeDtypeStruct((n_pad, d_pad), jnp.bfloat16)),
        compiler_params=pltpu.CompilerParams(
            dimension_semantics=("parallel",), vmem_limit_bytes=u1_vmem),
        cost_estimate=u1_cost,
    )(feat_p, R_p)

    # ---- hop 1: per-tile adjacency merge, bf16 M cache, U2 = M @ U1 ---------------
    hop1_vmem = _vmem_limit(
        2 * n_layers * tm * tc * a_bytes        # A tile (double-buffered)
        + 2 * n_pad * d_pad * 2                 # resident bf16 U1
        + 2 * tm * tc * 2                       # M cache tile
        + 2 * tm * d_pad * (4 + 2)              # U2 outputs
        + tm * d_pad * 4                        # accumulator scratch
        + 3 * tm * tc * 4)                      # in-kernel f32 merge temporaries
    hop1_cost = pl.CostEstimate(
        flops=2 * n_pad * n_pad * d_pad + 2 * n_layers * n_pad * n_pad,
        transcendentals=0,
        bytes_accessed=(n_layers * n_pad * n_pad * a_bytes + n_pad * n_pad * 2
                        + n_pad * d_pad * (2 + 4 + 2)))
    m_cache, u2f, u2b = pl.pallas_call(
        _hop1_kernel,
        grid=(rows, cols),
        in_specs=[
            pl.BlockSpec(memory_space=pltpu.MemorySpace.SMEM),            # wb
            pl.BlockSpec((n_layers, tm, tc), lambda r, c: (0, r, c)),     # A tile
            pl.BlockSpec((n_pad, d_pad), lambda r, c: (0, 0)),            # U1 bf16 (resident)
        ],
        out_specs=[
            pl.BlockSpec((tm, tc), lambda r, c: (r, c)),                  # M cache tile
            pl.BlockSpec((tm, d_pad), lambda r, c: (r, 0)),               # U2 f32 rows
            pl.BlockSpec((tm, d_pad), lambda r, c: (r, 0)),               # U2 bf16 rows
        ],
        out_shape=(jax.ShapeDtypeStruct((n_pad, n_pad), jnp.bfloat16),
                   jax.ShapeDtypeStruct((n_pad, d_pad), jnp.float32),
                   jax.ShapeDtypeStruct((n_pad, d_pad), jnp.bfloat16)),
        scratch_shapes=[pltpu.VMEM((tm, d_pad), jnp.float32)],
        compiler_params=pltpu.CompilerParams(
            dimension_semantics=("parallel", "arbitrary"),
            vmem_limit_bytes=hop1_vmem),
        cost_estimate=hop1_cost,
    )(wb, A_packed, u1b)

    # ---- hop 2: U3 = M @ U2 from the bf16 M cache + final weighted merge ----------
    hop2_vmem = _vmem_limit(
        2 * tm * tc * 2                         # M tile
        + 2 * n_pad * d_pad * 2                 # resident bf16 U2
        + 2 * tm * d_pad * 4 * 2                # row-tiled f32 U1 / U2
        + 2 * tm * d_pad * 4                    # output
        + tm * d_pad * 4                        # accumulator scratch
        + 2 * tm * d_pad * 4)                   # temporaries
    hop2_cost = pl.CostEstimate(
        flops=2 * n_pad * n_pad * d_pad + 6 * n_pad * d_pad, transcendentals=0,
        bytes_accessed=n_pad * n_pad * 2 + n_pad * d_pad * (2 + 4 + 4 + 4))
    out = pl.pallas_call(
        _hop2_kernel,
        grid=(rows, cols),
        in_specs=[
            pl.BlockSpec(memory_space=pltpu.MemorySpace.SMEM),            # wa
            pl.BlockSpec((tm, tc), lambda r, c: (r, c)),                  # M tile
            pl.BlockSpec((n_pad, d_pad), lambda r, c: (0, 0)),            # U2 bf16 (resident)
            pl.BlockSpec((tm, d_pad), lambda r, c: (r, 0)),               # U1 f32 rows
            pl.BlockSpec((tm, d_pad), lambda r, c: (r, 0)),               # U2 f32 rows
        ],
        out_specs=pl.BlockSpec((tm, d_pad), lambda r, c: (r, 0)),
        out_shape=jax.ShapeDtypeStruct((n_pad, d_pad), jnp.float32),
        scratch_shapes=[pltpu.VMEM((tm, d_pad), jnp.float32)],
        compiler_params=pltpu.CompilerParams(
            dimension_semantics=("parallel", "arbitrary"),
            vmem_limit_bytes=hop2_vmem),
        cost_estimate=hop2_cost,
    )(wa, m_cache, u2b, u1f, u2f)

    return out[:n, :dim]


# --------------------------------------------------------------------------- references

def fame_reference(weight_b, weight_a, A, feature, R, *, mixed):
    """Plain-JAX reference. mixed=True mirrors the kernel's bf16/f32 dtype strategy."""
    wb = weight_b.reshape(-1).astype(jnp.float32)
    wa = weight_a.reshape(-1).astype(jnp.float32)
    M = jnp.einsum('k,kij->ij', wb, A.astype(jnp.float32))
    if mixed:
        U1 = jnp.dot(feature.astype(jnp.float32), R.astype(jnp.float32),
                     preferred_element_type=jnp.float32)
        Mb = M.astype(jnp.bfloat16)
        U2 = jnp.dot(Mb, U1.astype(jnp.bfloat16), preferred_element_type=jnp.float32)
        U3 = jnp.dot(Mb, U2.astype(jnp.bfloat16), preferred_element_type=jnp.float32)
    else:
        hi = jax.lax.Precision.HIGHEST
        U1 = jnp.dot(feature.astype(jnp.float32), R.astype(jnp.float32), precision=hi)
        U2 = jnp.dot(M, U1, precision=hi)
        U3 = jnp.dot(M, U2, precision=hi)
    return wa[0] * U1 + wa[1] * U2 + wa[2] * U3


# --------------------------------------------------------------------------- test

if __name__ == "__main__":
    # Small shapes consistent with the module's forward:
    #   N = 384 nodes (3 row tiles x 3 column tiles of 128 -> exercises the 2-D grid
    #   and the column accumulation), 4 multiplex layers, nfeat = 64, dim = 32.
    N, NFEAT, DIM, LAYERS = 384, 64, 32, 4
    TM, TC = 128, 128

    key = jax.random.PRNGKey(0)
    k_wb, k_wa, k_A, k_feat, k_R = jax.random.split(key, 5)

    # Parameters: torch.nn.init.uniform_(w, a=0, b=0.1) -> U[0, 0.1)
    weight_b = jax.random.uniform(k_wb, (LAYERS, 1), jnp.float32, 0.0, 0.1)
    weight_a = jax.random.uniform(k_wa, (3, 1), jnp.float32, 0.0, 0.1)

    # Synthetic multiplex adjacency (sparse-ish, symmetric, entries in {0, 0.5, 1}).
    raw = jax.random.uniform(k_A, (LAYERS, N, N), jnp.float32)
    adj = (raw > 0.8).astype(jnp.float32)
    A = 0.5 * (adj + jnp.transpose(adj, (0, 2, 1)))
    feature = jax.random.normal(k_feat, (N, NFEAT), jnp.float32)

    # Gaussian random projection matrix, components ~ N(0, 1/dim).
    R = jax.random.normal(k_R, (NFEAT, DIM), jnp.float32) / math.sqrt(DIM)

    packed = prepare_inputs(A, feature, R, tm=TM, tc=TC)       # one-time setup
    fwd = jax.jit(fame_forward, static_argnames=("n", "dim", "a_scale", "tm", "tc"))
    U = fwd(weight_b, weight_a, packed["A"], packed["feature"], packed["R"],
            n=N, dim=DIM, a_scale=packed["a_scale"], tm=packed["tm"], tc=packed["tc"])
    U = jax.block_until_ready(U)

    U_mixed = fame_reference(weight_b, weight_a, A, feature, R, mixed=True)
    U_f32 = fame_reference(weight_b, weight_a, A, feature, R, mixed=False)

    assert U.shape == (N, DIM)
    # bf16 M / U operands on the MXU give ~0.4% relative error vs pure f32; the looser
    # tolerance vs the f32 reference is expected behaviour, not a bug.
    assert jnp.allclose(U, U_mixed, rtol=1e-2, atol=2e-3), "mismatch vs mixed-precision ref"
    assert jnp.allclose(U, U_f32, rtol=5e-2, atol=2e-2), "mismatch vs f32 ref"

    print("KERNEL_OK")
</pallas_src>

<mosaic_0001>
module attributes {stable_mosaic.version = 11 : i64} {
  func.func @_hop1_kernel(%arg0: i32, %arg1: i32, %arg2: memref<4xf32, #tpu.memory_space<smem>>, %arg3: memref<4x128x128xi8, #tpu.memory_space<vmem>>, %arg4: memref<384x128xbf16, #tpu.memory_space<vmem>>, %arg5: memref<128x128xbf16, #tpu.memory_space<vmem>>, %arg6: memref<128x128xf32, #tpu.memory_space<vmem>>, %arg7: memref<128x128xbf16, #tpu.memory_space<vmem>>, %arg8: memref<128x128xf32, #tpu.memory_space<vmem>>) attributes {dimension_semantics = [#tpu.dimension_semantics<parallel>, #tpu.dimension_semantics<arbitrary>], iteration_bounds = array<i64: 3, 3>, scalar_prefetch = 0 : i64, scratch_operands = 1 : i64, tpu.core_type = #tpu.core_type<tc>, window_params = [{transform_indices = @transform_0, window_bounds = array<i64: 4>}, {transform_indices = @transform_1, window_bounds = array<i64: 4, 128, 128>}, {pipeline_mode = #tpu.pipeline_mode<synchronous>, transform_indices = @transform_2, window_bounds = array<i64: 384, 128>}, {transform_indices = @transform_3, window_bounds = array<i64: 128, 128>}, {transform_indices = @transform_4, window_bounds = array<i64: 128, 128>}, {transform_indices = @transform_5, window_bounds = array<i64: 128, 128>}]} {
    %c0_i32 = arith.constant 0 : i32
    %0 = arith.cmpi eq, %arg1, %c0_i32 : i32
    %1 = arith.extui %0 : i1 to i32
    %c0_i32_0 = arith.constant 0 : i32
    %2 = arith.cmpi ne, %1, %c0_i32_0 : i32
    scf.if %2 {
      %cst_21 = arith.constant 0.000000e+00 : f32
      %43 = vector.broadcast %cst_21 : f32 to vector<128x128xf32>
      %c0_22 = arith.constant 0 : index
      %c0_23 = arith.constant 0 : index
      %44 = vector.load %arg8[%c0_22, %c0_23] : memref<128x128xf32, #tpu.memory_space<vmem>>, vector<128x128xf32>
      tpu.vector_store %arg8[%c0_22, %c0_23], %43 {strides = array<i32>} : memref<128x128xf32, #tpu.memory_space<vmem>>, vector<128x128xf32>,
    } else {
    }
    %c0 = arith.constant 0 : index
    %3 = memref.load %arg2[%c0] : memref<4xf32, #tpu.memory_space<smem>>
    %c0_1 = arith.constant 0 : index
    %c0_2 = arith.constant 0 : index
    %c0_3 = arith.constant 0 : index
    %4 = vector.load %arg3[%c0_1, %c0_2, %c0_3] : memref<4x128x128xi8, #tpu.memory_space<vmem>>, vector<1x128x128xi8>
    %5 = vector.shape_cast %4 : vector<1x128x128xi8> to vector<128x128xi8>
    %6 = arith.sitofp %5 : vector<128x128xi8> to vector<128x128xf32>
    %7 = vector.broadcast %3 : f32 to vector<128x128xf32>
    %8 = arith.mulf %7, %6 : vector<128x128xf32>
    %c1 = arith.constant 1 : index
    %9 = memref.load %arg2[%c1] : memref<4xf32, #tpu.memory_space<smem>>
    %c1_4 = arith.constant 1 : index
    %c0_5 = arith.constant 0 : index
    %c0_6 = arith.constant 0 : index
    %10 = vector.load %arg3[%c1_4, %c0_5, %c0_6] : memref<4x128x128xi8, #tpu.memory_space<vmem>>, vector<1x128x128xi8>
    %11 = vector.shape_cast %10 : vector<1x128x128xi8> to vector<128x128xi8>
    %12 = arith.sitofp %11 : vector<128x128xi8> to vector<128x128xf32>
    %13 = vector.broadcast %9 : f32 to vector<128x128xf32>
    %14 = arith.mulf %13, %12 : vector<128x128xf32>
    %15 = arith.addf %8, %14 : vector<128x128xf32>
    %c2 = arith.constant 2 : index
    %16 = memref.load %arg2[%c2] : memref<4xf32, #tpu.memory_space<smem>>
    %c2_7 = arith.constant 2 : index
    %c0_8 = arith.constant 0 : index
    %c0_9 = arith.constant 0 : index
    %17 = vector.load %arg3[%c2_7, %c0_8, %c0_9] : memref<4x128x128xi8, #tpu.memory_space<vmem>>, vector<1x128x128xi8>
    %18 = vector.shape_cast %17 : vector<1x128x128xi8> to vector<128x128xi8>
    %19 = arith.sitofp %18 : vector<128x128xi8> to vector<128x128xf32>
    %20 = vector.broadcast %16 : f32 to vector<128x128xf32>
    %21 = arith.mulf %20, %19 : vector<128x128xf32>
    %22 = arith.addf %15, %21 : vector<128x128xf32>
    %c3 = arith.constant 3 : index
    %23 = memref.load %arg2[%c3] : memref<4xf32, #tpu.memory_space<smem>>
    %c3_10 = arith.constant 3 : index
    %c0_11 = arith.constant 0 : index
    %c0_12 = arith.constant 0 : index
    %24 = vector.load %arg3[%c3_10, %c0_11, %c0_12] : memref<4x128x128xi8, #tpu.memory_space<vmem>>, vector<1x128x128xi8>
    %25 = vector.shape_cast %24 : vector<1x128x128xi8> to vector<128x128xi8>
    %26 = arith.sitofp %25 : vector<128x128xi8> to vector<128x128xf32>
    %27 = vector.broadcast %23 : f32 to vector<128x128xf32>
    %28 = arith.mulf %27, %26 : vector<128x128xf32>
    %29 = arith.addf %22, %28 : vector<128x128xf32>
    %30 = arith.truncf %29 : vector<128x128xf32> to vector<128x128xbf16>
    %c0_13 = arith.constant 0 : index
    %c0_14 = arith.constant 0 : index
    %31 = vector.load %arg5[%c0_13, %c0_14] : memref<128x128xbf16, #tpu.memory_space<vmem>>, vector<128x128xbf16>
    tpu.vector_store %arg5[%c0_13, %c0_14], %30 {strides = array<i32>} : memref<128x128xbf16, #tpu.memory_space<vmem>>, vector<128x128xbf16>,
    %c128_i32 = arith.constant 128 : i32
    %32 = arith.muli %arg1, %c128_i32 : i32
    %33 = tpu.assume_multiple %32, 128 : i32
    %c0_15 = arith.constant 0 : index
    %c0_16 = arith.constant 0 : index
    %34 = vector.load %arg8[%c0_15, %c0_16] : memref<128x128xf32, #tpu.memory_space<vmem>>, vector<128x128xf32>
    %35 = arith.index_cast %33 : i32 to index
    %c0_17 = arith.constant 0 : index
    %36 = vector.load %arg4[%35, %c0_17] : memref<384x128xbf16, #tpu.memory_space<vmem>>, vector<128x128xbf16>
    %cst = arith.constant dense<0.000000e+00> : vector<128x128xf32>
    %37 = tpu.matmul %30, %36, %cst {dimension_numbers = #tpu.dot_dimension_numbers<[1], [0], [0], [1], [0, 0, 1, 1], [], []>} : vector<128x128xbf16>, vector<128x128xbf16>, vector<128x128xf32> -> vector<128x128xf32>
    %38 = arith.addf %34, %37 : vector<128x128xf32>
    %c0_18 = arith.constant 0 : index
    %c0_19 = arith.constant 0 : index
    %39 = vector.load %arg8[%c0_18, %c0_19] : memref<128x128xf32, #tpu.memory_space<vmem>>, vector<128x128xf32>
    tpu.vector_store %arg8[%c0_18, %c0_19], %38 {strides = array<i32>} : memref<128x128xf32, #tpu.memory_space<vmem>>, vector<128x128xf32>,
    %c2_i32 = arith.constant 2 : i32
    %40 = arith.cmpi eq, %arg1, %c2_i32 : i32
    %41 = arith.extui %40 : i1 to i32
    %c0_i32_20 = arith.constant 0 : i32
    %42 = arith.cmpi ne, %41, %c0_i32_20 : i32
    scf.if %42 {
      %c0_21 = arith.constant 0 : index
      %c0_22 = arith.constant 0 : index
      %43 = vector.load %arg8[%c0_21, %c0_22] : memref<128x128xf32, #tpu.memory_space<vmem>>, vector<128x128xf32>
      %c0_23 = arith.constant 0 : index
      %c0_24 = arith.constant 0 : index
      %44 = vector.load %arg6[%c0_23, %c0_24] : memref<128x128xf32, #tpu.memory_space<vmem>>, vector<128x128xf32>
      tpu.vector_store %arg6[%c0_23, %c0_24], %43 {strides = array<i32>} : memref<128x128xf32, #tpu.memory_space<vmem>>, vector<128x128xf32>,
      %c0_25 = arith.constant 0 : index
      %c0_26 = arith.constant 0 : index
      %45 = vector.load %arg8[%c0_25, %c0_26] : memref<128x128xf32, #tpu.memory_space<vmem>>, vector<128x128xf32>
      %46 = arith.truncf %45 : vector<128x128xf32> to vector<128x128xbf16>
      %c0_27 = arith.constant 0 : index
      %c0_28 = arith.constant 0 : index
      %47 = vector.load %arg7[%c0_27, %c0_28] : memref<128x128xbf16, #tpu.memory_space<vmem>>, vector<128x128xbf16>
      tpu.vector_store %arg7[%c0_27, %c0_28], %46 {strides = array<i32>} : memref<128x128xbf16, #tpu.memory_space<vmem>>, vector<128x128xbf16>,
    } else {
    }
    return
  }
  func.func @transform_0(%arg0: i32, %arg1: i32) -> i32 {
    %c0_i32 = arith.constant 0 : i32
    %c0_i32_0 = arith.constant 0 : i32
    return %c0_i32 : i32
  }
  func.func @transform_1(%arg0: i32, %arg1: i32) -> (i32, i32, i32) {
    %c0_i32 = arith.constant 0 : i32
    %c0_i32_0 = arith.constant 0 : i32
    return %c0_i32, %arg0, %arg1 : i32, i32, i32
  }
  func.func @transform_2(%arg0: i32, %arg1: i32) -> (i32, i32) {
    %c0_i32 = arith.constant 0 : i32
    %c0_i32_0 = arith.constant 0 : i32
    %c0_i32_1 = arith.constant 0 : i32
    return %c0_i32, %c0_i32_0 : i32, i32
  }
  func.func @transform_3(%arg0: i32, %arg1: i32) -> (i32, i32) {
    %c0_i32 = arith.constant 0 : i32
    return %arg0, %arg1 : i32, i32
  }
  func.func @transform_4(%arg0: i32, %arg1: i32) -> (i32, i32) {
    %c0_i32 = arith.constant 0 : i32
    %c0_i32_0 = arith.constant 0 : i32
    return %arg0, %c0_i32 : i32, i32
  }
  func.func @transform_5(%arg0: i32, %arg1: i32) -> (i32, i32) {
    %c0_i32 = arith.constant 0 : i32
    %c0_i32_0 = arith.constant 0 : i32
    return %arg0, %c0_i32 : i32, i32
  }
}

module attributes {stable_mosaic.version = 11 : i64} {
  func.func @_u1_kernel(%arg0: i32, %arg1: memref<128x64xf32, #tpu.memory_space<vmem>>, %arg2: memref<64x128xf32, #tpu.memory_space<vmem>>, %arg3: memref<128x128xf32, #tpu.memory_space<vmem>>, %arg4: memref<128x128xbf16, #tpu.memory_space<vmem>>) attributes {dimension_semantics = [#tpu.dimension_semantics<parallel>], iteration_bounds = array<i64: 3>, scalar_prefetch = 0 : i64, scratch_operands = 0 : i64, tpu.core_type = #tpu.core_type<tc>, window_params = [{transform_indices = @transform_0, window_bounds = array<i64: 128, 64>}, {pipeline_mode = #tpu.pipeline_mode<synchronous>, transform_indices = @transform_1, window_bounds = array<i64: 64, 128>}, {transform_indices = @transform_2, window_bounds = array<i64: 128, 128>}, {transform_indices = @transform_3, window_bounds = array<i64: 128, 128>}]} {
    %c0 = arith.constant 0 : index
    %c0_0 = arith.constant 0 : index
    %0 = vector.load %arg1[%c0, %c0_0] : memref<128x64xf32, #tpu.memory_space<vmem>>, vector<128x64xf32>
    %c0_1 = arith.constant 0 : index
    %c0_2 = arith.constant 0 : index
    %1 = vector.load %arg2[%c0_1, %c0_2] : memref<64x128xf32, #tpu.memory_space<vmem>>, vector<64x128xf32>
    %cst = arith.constant dense<0.000000e+00> : vector<128x128xf32>
    %2 = tpu.matmul %0, %1, %cst {dimension_numbers = #tpu.dot_dimension_numbers<[1], [0], [0], [1], [0, 0, 1, 1], [], []>} : vector<128x64xf32>, vector<64x128xf32>, vector<128x128xf32> -> vector<128x128xf32>
    %c0_3 = arith.constant 0 : index
    %c0_4 = arith.constant 0 : index
    %3 = vector.load %arg3[%c0_3, %c0_4] : memref<128x128xf32, #tpu.memory_space<vmem>>, vector<128x128xf32>
    tpu.vector_store %arg3[%c0_3, %c0_4], %2 {strides = array<i32>} : memref<128x128xf32, #tpu.memory_space<vmem>>, vector<128x128xf32>,
    %4 = arith.truncf %2 : vector<128x128xf32> to vector<128x128xbf16>
    %c0_5 = arith.constant 0 : index
    %c0_6 = arith.constant 0 : index
    %5 = vector.load %arg4[%c0_5, %c0_6] : memref<128x128xbf16, #tpu.memory_space<vmem>>, vector<128x128xbf16>
    tpu.vector_store %arg4[%c0_5, %c0_6], %4 {strides = array<i32>} : memref<128x128xbf16, #tpu.memory_space<vmem>>, vector<128x128xbf16>,
    return
  }
  func.func @transform_0(%arg0: i32) -> (i32, i32) {
    %c0_i32 = arith.constant 0 : i32
    %c0_i32_0 = arith.constant 0 : i32
    return %arg0, %c0_i32 : i32, i32
  }
  func.func @transform_1(%arg0: i32) -> (i32, i32) {
    %c0_i32 = arith.constant 0 : i32
    %c0_i32_0 = arith.constant 0 : i32
    %c0_i32_1 = arith.constant 0 : i32
    return %c0_i32, %c0_i32_0 : i32, i32
  }
  func.func @transform_2(%arg0: i32) -> (i32, i32) {
    %c0_i32 = arith.constant 0 : i32
    %c0_i32_0 = arith.constant 0 : i32
    return %arg0, %c0_i32 : i32, i32
  }
  func.func @transform_3(%arg0: i32) -> (i32, i32) {
    %c0_i32 = arith.constant 0 : i32
    %c0_i32_0 = arith.constant 0 : i32
    return %arg0, %c0_i32 : i32, i32
  }
}

module attributes {stable_mosaic.version = 11 : i64} {
  func.func @_hop2_kernel(%arg0: i32, %arg1: i32, %arg2: memref<3xf32, #tpu.memory_space<smem>>, %arg3: memref<128x128xbf16, #tpu.memory_space<vmem>>, %arg4: memref<384x128xbf16, #tpu.memory_space<vmem>>, %arg5: memref<128x128xf32, #tpu.memory_space<vmem>>, %arg6: memref<128x128xf32, #tpu.memory_space<vmem>>, %arg7: memref<128x128xf32, #tpu.memory_space<vmem>>, %arg8: memref<128x128xf32, #tpu.memory_space<vmem>>) attributes {dimension_semantics = [#tpu.dimension_semantics<parallel>, #tpu.dimension_semantics<arbitrary>], iteration_bounds = array<i64: 3, 3>, scalar_prefetch = 0 : i64, scratch_operands = 1 : i64, tpu.core_type = #tpu.core_type<tc>, window_params = [{transform_indices = @transform_0, window_bounds = array<i64: 3>}, {transform_indices = @transform_1, window_bounds = array<i64: 128, 128>}, {pipeline_mode = #tpu.pipeline_mode<synchronous>, transform_indices = @transform_2, window_bounds = array<i64: 384, 128>}, {transform_indices = @transform_3, window_bounds = array<i64: 128, 128>}, {transform_indices = @transform_4, window_bounds = array<i64: 128, 128>}, {transform_indices = @transform_5, window_bounds = array<i64: 128, 128>}]} {
    %c0_i32 = arith.constant 0 : i32
    %0 = arith.cmpi eq, %arg1, %c0_i32 : i32
    %1 = arith.extui %0 : i1 to i32
    %c0_i32_0 = arith.constant 0 : i32
    %2 = arith.cmpi ne, %1, %c0_i32_0 : i32
    scf.if %2 {
      %cst_8 = arith.constant 0.000000e+00 : f32
      %15 = vector.broadcast %cst_8 : f32 to vector<128x128xf32>
      %c0_9 = arith.constant 0 : index
      %c0_10 = arith.constant 0 : index
      %16 = vector.load %arg8[%c0_9, %c0_10] : memref<128x128xf32, #tpu.memory_space<vmem>>, vector<128x128xf32>
      tpu.vector_store %arg8[%c0_9, %c0_10], %15 {strides = array<i32>} : memref<128x128xf32, #tpu.memory_space<vmem>>, vector<128x128xf32>,
    } else {
    }
    %c128_i32 = arith.constant 128 : i32
    %3 = arith.muli %arg1, %c128_i32 : i32
    %4 = tpu.assume_multiple %3, 128 : i32
    %c0 = arith.constant 0 : index
    %c0_1 = arith.constant 0 : index
    %5 = vector.load %arg8[%c0, %c0_1] : memref<128x128xf32, #tpu.memory_space<vmem>>, vector<128x128xf32>
    %c0_2 = arith.constant 0 : index
    %c0_3 = arith.constant 0 : index
    %6 = vector.load %arg3[%c0_2, %c0_3] : memref<128x128xbf16, #tpu.memory_space<vmem>>, vector<128x128xbf16>
    %7 = arith.index_cast %4 : i32 to index
    %c0_4 = arith.constant 0 : index
    %8 = vector.load %arg4[%7, %c0_4] : memref<384x128xbf16, #tpu.memory_space<vmem>>, vector<128x128xbf16>
    %cst = arith.constant dense<0.000000e+00> : vector<128x128xf32>
    %9 = tpu.matmul %6, %8, %cst {dimension_numbers = #tpu.dot_dimension_numbers<[1], [0], [0], [1], [0, 0, 1, 1], [], []>} : vector<128x128xbf16>, vector<128x128xbf16>, vector<128x128xf32> -> vector<128x128xf32>
    %10 = arith.addf %5, %9 : vector<128x128xf32>
    %c0_5 = arith.constant 0 : index
    %c0_6 = arith.constant 0 : index
    %11 = vector.load %arg8[%c0_5, %c0_6] : memref<128x128xf32, #tpu.memory_space<vmem>>, vector<128x128xf32>
    tpu.vector_store %arg8[%c0_5, %c0_6], %10 {strides = array<i32>} : memref<128x128xf32, #tpu.memory_space<vmem>>, vector<128x128xf32>,
    %c2_i32 = arith.constant 2 : i32
    %12 = arith.cmpi eq, %arg1, %c2_i32 : i32
    %13 = arith.extui %12 : i1 to i32
    %c0_i32_7 = arith.constant 0 : i32
    %14 = arith.cmpi ne, %13, %c0_i32_7 : i32
    scf.if %14 {
      %c0_8 = arith.constant 0 : index
      %15 = memref.load %arg2[%c0_8] : memref<3xf32, #tpu.memory_space<smem>>
      %c0_9 = arith.constant 0 : index
      %c0_10 = arith.constant 0 : index
      %16 = vector.load %arg5[%c0_9, %c0_10] : memref<128x128xf32, #tpu.memory_space<vmem>>, vector<128x128xf32>
      %17 = vector.broadcast %15 : f32 to vector<128x128xf32>
      %18 = arith.mulf %17, %16 : vector<128x128xf32>
      %c1 = arith.constant 1 : index
      %19 = memref.load %arg2[%c1] : memref<3xf32, #tpu.memory_space<smem>>
      %c0_11 = arith.constant 0 : index
      %c0_12 = arith.constant 0 : index
      %20 = vector.load %arg6[%c0_11, %c0_12] : memref<128x128xf32, #tpu.memory_space<vmem>>, vector<128x128xf32>
      %21 = vector.broadcast %19 : f32 to vector<128x128xf32>
      %22 = arith.mulf %21, %20 : vector<128x128xf32>
      %23 = arith.addf %18, %22 : vector<128x128xf32>
      %c2 = arith.constant 2 : index
      %24 = memref.load %arg2[%c2] : memref<3xf32, #tpu.memory_space<smem>>
      %c0_13 = arith.constant 0 : index
      %c0_14 = arith.constant 0 : index
      %25 = vector.load %arg8[%c0_13, %c0_14] : memref<128x128xf32, #tpu.memory_space<vmem>>, vector<128x128xf32>
      %26 = vector.broadcast %24 : f32 to vector<128x128xf32>
      %27 = arith.mulf %26, %25 : vector<128x128xf32>
      %28 = arith.addf %23, %27 : vector<128x128xf32>
      %c0_15 = arith.constant 0 : index
      %c0_16 = arith.constant 0 : index
      %29 = vector.load %arg7[%c0_15, %c0_16] : memref<128x128xf32, #tpu.memory_space<vmem>>, vector<128x128xf32>
      tpu.vector_store %arg7[%c0_15, %c0_16], %28 {strides = array<i32>} : memref<128x128xf32, #tpu.memory_space<vmem>>, vector<128x128xf32>,
    } else {
    }
    return
  }
  func.func @transform_0(%arg0: i32, %arg1: i32) -> i32 {
    %c0_i32 = arith.constant 0 : i32
    %c0_i32_0 = arith.constant 0 : i32
    return %c0_i32 : i32
  }
  func.func @transform_1(%arg0: i32, %arg1: i32) -> (i32, i32) {
    %c0_i32 = arith.constant 0 : i32
    return %arg0, %arg1 : i32, i32
  }
  func.func @transform_2(%arg0: i32, %arg1: i32) -> (i32, i32) {
    %c0_i32 = arith.constant 0 : i32
    %c0_i32_0 = arith.constant 0 : i32
    %c0_i32_1 = arith.constant 0 : i32
    return %c0_i32, %c0_i32_0 : i32, i32
  }
  func.func @transform_3(%arg0: i32, %arg1: i32) -> (i32, i32) {
    %c0_i32 = arith.constant 0 : i32
    %c0_i32_0 = arith.constant 0 : i32
    return %arg0, %c0_i32 : i32, i32
  }
  func.func @transform_4(%arg0: i32, %arg1: i32) -> (i32, i32) {
    %c0_i32 = arith.constant 0 : i32
    %c0_i32_0 = arith.constant 0 : i32
    return %arg0, %c0_i32 : i32, i32
  }
  func.func @transform_5(%arg0: i32, %arg1: i32) -> (i32, i32) {
    %c0_i32 = arith.constant 0 : i32
    %c0_i32_0 = arith.constant 0 : i32
    return %arg0, %c0_i32 : i32, i32
  }
}

</mosaic_0001>

<llo_original>
// kernel: fame_forward.3
$region0: #{fame_forward.3}
  #allocation0 [shape = 'u32[]', space=smem, size = 0x4, offset = 0x4, fixed_abs, tag = 'smem constant byte address 0x4 - core index']
  #allocation1 [shape = 'u32[72,128]{1,0:T(1,128)}', space=vmem, size = 0x9000, scoped, tag = 'internal scratch']
  %s0 = inlined_call_operand.vmem [shape: f32[384,64], index: 0, kind: input, shape index: {}]
  %s1 = inlined_call_operand.vmem [shape: f32[64,128], index: 1, kind: input, shape index: {}]
  %s2 = inlined_call_operand.vmem [shape: f32[384,128], index: 2, kind: output, shape index: {0}]
  %s3 = inlined_call_operand.vmem [shape: bf16[384,128], index: 3, kind: output, shape index: {1}]
  %4 = xla_tuple %s2, %s3
  %s5 = sld [smem:[#allocation0]]
  $region49: #{fame_forward.3} parent=0
    _
  %s7 = ssub.s32 1, %s5
  %s8 = scalar_select 0, %s7, %s5
  loop: start=0, step=1, limit=5
  $region2: #{fame_forward.3} parent=0 // loop_pre_header
    _
  $region3: #{fame_forward.3} parent=0 // loop_header
    %s10 = sphi 0, %s14
    %p11 = scmp.ge.s32.totalorder %s10, 5
    %s20 = sphi 0, %s22
    %s23 = sphi 0, %s20
    %s24 = sphi 0, %s23
    %s40 = sphi 0, %s24
    %s44 = sphi 0, %s44
    %s46 = sphi 0, %s44
    %s47 = sphi 0, %s46
    %s61 = sphi 0, %s47
    %s67 = sphi 0, %s69
    %s70 = sphi 0, %s67
    %s71 = sphi 0, %s70
    %s87 = sphi 0, %s71
    %s93 = sphi 0, %s95
    %s96 = sphi 0, %s93
    %s97 = sphi 0, %s96
    %s113 = sphi 0, %s97
  $region4: #{fame_forward.3} parent=0 // loop_header_branch
    %13 = sbr.rel (%p11) target = $region8
  $region5: #{fame_forward.3} parent=0 // loop_body
    %s15 = ssub.s32 %s10, 1
    %s16 = ssub.s32 %s10, 2
    %s17 = sadd.s32 %s10, 1
    %s18 = ssub.s32 %s10, %s17
    %p19 = scmp.eq.s32.totalorder %s18, 0
    %s21 = sadd.s32 %s20, 1
    %s22 = scalar_select %p19, %s20, %s21
    %p25 = pneg %p19
    %p26 = scmp.eq.s32.totalorder %s10, 2
    %p27 = por %p25, %p26
    %p28 = scmp.ne.s32.totalorder %s20, %s23
    %p29 = scmp.eq.s32.totalorder %s10, 0
    %p30 = por %p28, %p29
    %p31 = scmp.ne.s32.totalorder %s20, %s23
    %p32 = scmp.eq.s32.totalorder %s15, 2
    %p33 = por %p31, %p32
    %p34 = scmp.ne.s32.totalorder %s23, %s24
    %p35 = scmp.eq.s32.totalorder %s15, 0
    %p36 = por %p34, %p35
    %p37 = scmp.ne.s32.totalorder %s23, %s24
    %p38 = scmp.eq.s32.totalorder %s16, 2
    %p39 = por %p37, %p38
    %p41 = scmp.ne.s32.totalorder %s24, %s40
    %p42 = scmp.eq.s32.totalorder %s16, 0
    %p43 = por %p41, %p42
    %s45 = sadd.s32 %s44, 1
    %p48 = scmp.eq.s32.totalorder %s10, 2
    %p49 = scmp.ne.s32.totalorder %s44, %s46
    %p50 = scmp.eq.s32.totalorder %s10, 0
    %p51 = por %p49, %p50
    %p52 = scmp.ne.s32.totalorder %s44, %s46
    %p53 = scmp.eq.s32.totalorder %s15, 2
    %p54 = por %p52, %p53
    %p55 = scmp.ne.s32.totalorder %s46, %s47
    %p56 = scmp.eq.s32.totalorder %s15, 0
    %p57 = por %p55, %p56
    %p58 = scmp.ne.s32.totalorder %s46, %s47
    %p59 = scmp.eq.s32.totalorder %s16, 2
    %p60 = por %p58, %p59
    %p62 = scmp.ne.s32.totalorder %s47, %s61
    %p63 = scmp.eq.s32.totalorder %s16, 0
    %p64 = por %p62, %p63
    %s65 = ssub.s32 %s10, %s17
    %p66 = scmp.eq.s32.totalorder %s65, 0
    %s68 = sadd.s32 %s67, 1
    %s69 = scalar_select %p66, %s67, %s68
    %p72 = pneg %p66
    %p73 = scmp.eq.s32.totalorder %s10, 2
    %p74 = por %p72, %p73
    %p75 = scmp.ne.s32.totalorder %s67, %s70
    %p76 = scmp.eq.s32.totalorder %s10, 0
    %p77 = por %p75, %p76
    %p78 = scmp.ne.s32.totalorder %s67, %s70
    %p79 = scmp.eq.s32.totalorder %s15, 2
    %p80 = por %p78, %p79
    %p81 = scmp.ne.s32.totalorder %s70, %s71
    %p82 = scmp.eq.s32.totalorder %s15, 0
    %p83 = por %p81, %p82
    %p84 = scmp.ne.s32.totalorder %s70, %s71
    %p85 = scmp.eq.s32.totalorder %s16, 2
    %p86 = por %p84, %p85
    %p88 = scmp.ne.s32.totalorder %s71, %s87
    %p89 = scmp.eq.s32.totalorder %s16, 0
    %p90 = por %p88, %p89
    %s91 = ssub.s32 %s10, %s17
    %p92 = scmp.eq.s32.totalorder %s91, 0
    %s94 = sadd.s32 %s93, 1
    %s95 = scalar_select %p92, %s93, %s94
    %p98 = pneg %p92
    %p99 = scmp.eq.s32.totalorder %s10, 2
    %p100 = por %p98, %p99
    %p101 = scmp.ne.s32.totalorder %s93, %s96
    %p102 = scmp.eq.s32.totalorder %s10, 0
    %p103 = por %p101, %p102
    %p104 = scmp.ne.s32.totalorder %s93, %s96
    %p105 = scmp.eq.s32.totalorder %s15, 2
    %p106 = por %p104, %p105
    %p107 = scmp.ne.s32.totalorder %s96, %s97
    %p108 = scmp.eq.s32.totalorder %s15, 0
    %p109 = por %p107, %p108
    %p110 = scmp.ne.s32.totalorder %s96, %s97
    %p111 = scmp.eq.s32.totalorder %s16, 2
    %p112 = por %p110, %p111
    %p114 = scmp.ne.s32.totalorder %s97, %s113
    %p115 = scmp.eq.s32.totalorder %s16, 0
    %p116 = por %p114, %p115
    %p117 = scmp.le.s32.totalorder 1, %s10
    %p118 = scmp.lt.s32.totalorder %s10, 4
    %p119 = pnand %p117, %p118
    %p120 = pneg %p119
    // Predicated region
    $region9: #{fame_forward.3} parent=5 // pred_check
      _
    $region10: #{fame_forward.3} parent=5 // pred_check_branch
      %122 = sbr.rel (%p119) target = $region12
    $region11: #{fame_forward.3} parent=5 // pred_region
      %s123 = ssub.s32 %s10, 1
      // Predicated region
      $region13: #{fame_forward.3} parent=11 // pred_check
        %p124 = pneg %p57
      $region14: #{fame_forward.3} parent=11 // pred_check_branch
        %126 = sbr.rel (%p124) target = $region16
      $region15: #{fame_forward.3} parent=11 // pred_region
        _
      $region16: #{fame_forward.3} parent=11 // pred_fallthru
        _
    $region12: #{fame_forward.3} parent=5 // pred_fallthru
      _
    %p127 = scmp.lt.s32.totalorder %s10, 3
    // Predicated region
    $region17: #{fame_forward.3} parent=5 // pred_check
      %p128 = pneg %p127
    $region18: #{fame_forward.3} parent=5 // pred_check_branch
      %130 = sbr.rel (%p128) target = $region20
    $region19: #{fame_forward.3} parent=5 // pred_region
      // Predicated region
      $region21: #{fame_forward.3} parent=19 // pred_check
        %p131 = pneg %p30
      $region22: #{fame_forward.3} parent=19 // pred_check_branch
        %133 = sbr.rel (%p131) target = $region24
      $region23: #{fame_forward.3} parent=19 // pred_region
        %s134 = smul.u32 16, %s10
        %p135 = scmp.lt.s32.totalorder %s134, 47
        %s136 = scalar_select %p135, %s134, 47
        %s137 = smul.addr %s136, 8
        %s138 = scalar_lea.vmem %s0, %s137
        %s139 = smul.u32 16, %s10
      $region24: #{fame_forward.3} parent=19 // pred_fallthru
        _
    $region20: #{fame_forward.3} parent=5 // pred_fallthru
      _
    %p140 = scmp.le.s32.totalorder 1, %s10
    %p141 = scmp.lt.s32.totalorder %s10, 4
    %p142 = pnand %p140, %p141
    %p143 = pneg %p142
    // Predicated region
    $region25: #{fame_forward.3} parent=5 // pred_check
      _
    $region26: #{fame_forward.3} parent=5 // pred_check_branch
      %145 = sbr.rel (%p142) target = $region28
    $region27: #{fame_forward.3} parent=5 // pred_region
      %s146 = ssub.s32 %s10, 1
      %s147 = smul.u32 16, %s15
      %p148 = scmp.lt.s32.totalorder %s147, 47
      %s149 = scalar_select %p148, %s147, 47
      %s150 = smul.addr %s149, 8
      %s151 = scalar_lea.vmem %s0, %s150
      %p152 = pneg %p36
      %p153 = pneg %p33
      %p154 = pneg %p57
      %p155 = pneg %p54
      %p156 = pneg %p83
      %p157 = pneg %p80
      %s158 = smul.u32 16, %s15
      %p159 = scmp.lt.s32.totalorder %s158, 47
      %s160 = scalar_select %p159, %s158, 47
      %s161 = smul.addr %s160, 8
      %s162 = scalar_lea.vmem %s2, %s161
      %p163 = pneg %p109
      %p164 = pneg %p106
      %s165 = smul.u32 16, %s15
      %p166 = scmp.lt.s32.totalorder %s165, 47
      %s167 = scalar_select %p166, %s165, 47
      %s168 = smul.addr %s167, 4
      %s169 = scalar_lea.vmem %s3, %s168
      %s170 = smul.u32 16, %s15
      %p171 = scmp.lt.s32.totalorder %s170, 47
      %s172 = scalar_select %p171, %s170, 47
      %s173 = smul.addr %s172, 8
      %s174 = scalar_lea.vmem %s0, %s173
      %s175 = smul.u32 16, %s15
      %s176 = smul.u32 16, %s15
      %p177 = scmp.lt.s32.totalorder %s176, 47
      %s178 = scalar_select %p177, %s176, 47
      %s179 = smul.addr %s178, 8
      %s180 = scalar_lea.vmem %s2, %s179
      %s181 = smul.u32 16, %s15
      %s182 = smul.u32 16, %s15
      %p183 = scmp.lt.s32.totalorder %s182, 47
      %s184 = scalar_select %p183, %s182, 47
      %s185 = smul.addr %s184, 4
      %s186 = scalar_lea.vmem %s3, %s185
      %s187 = smul.u32 16, %s15
      %v188 = vld [vmem:[%s174] sm:$0xff]
      %v189 = vld [vmem:[%s174 + $0x8] sm:$0xff]
      %v190 = vld [vmem:[%s174 + $0x10] sm:$0xff]
      %v191 = vld [vmem:[%s174 + $0x18] sm:$0xff]
      %v192 = vld [vmem:[%s174 + $0x20] sm:$0xff]
      %v193 = vld [vmem:[%s174 + $0x28] sm:$0xff]
      %v194 = vld [vmem:[%s174 + $0x30] sm:$0xff]
      %v195 = vld [vmem:[%s174 + $0x38] sm:$0xff]
      %v196 = vld [vmem:[%s174 + $0x40] sm:$0xff]
      %v197 = vld [vmem:[%s174 + $0x48] sm:$0xff]
      %v198 = vld [vmem:[%s174 + $0x50] sm:$0xff]
      %v199 = vld [vmem:[%s174 + $0x58] sm:$0xff]
      %v200 = vld [vmem:[%s174 + $0x60] sm:$0xff]
      %v201 = vld [vmem:[%s174 + $0x68] sm:$0xff]
      %v202 = vld [vmem:[%s174 + $0x70] sm:$0xff]
      %v203 = vld [vmem:[%s174 + $0x78] sm:$0xff]
      %v204 = vld [vmem:[%s1] sm:$0xff]
      %v205 = vld [vmem:[%s1 + $0x8] sm:$0xff]
      %v206 = vld [vmem:[%s1 + $0x10] sm:$0xff]
      %v207 = vld [vmem:[%s1 + $0x18] sm:$0xff]
      %v208 = vld [vmem:[%s1 + $0x20] sm:$0xff]
      %v209 = vld [vmem:[%s1 + $0x28] sm:$0xff]
      %v210 = vld [vmem:[%s1 + $0x30] sm:$0xff]
      %v211 = vld [vmem:[%s1 + $0x38] sm:$0xff]
      %vm212 = vcmask 523264
      %v214 = vsel %vm212, %v188, 0
      %v217 = vsel %vm212, %v189, 0
      %v220 = vsel %vm212, %v190, 0
      %v223 = vsel %vm212, %v191, 0
      %v226 = vsel %vm212, %v192, 0
      %v229 = vsel %vm212, %v193, 0
      %v232 = vsel %vm212, %v194, 0
      %v235 = vsel %vm212, %v195, 0
      %v238 = vsel %vm212, %v196, 0
      %v241 = vsel %vm212, %v197, 0
      %v244 = vsel %vm212, %v198, 0
      %v247 = vsel %vm212, %v199, 0
      %v250 = vsel %vm212, %v200, 0
      %v253 = vsel %vm212, %v201, 0
      %v256 = vsel %vm212, %v202, 0
      %v259 = vsel %vm212, %v203, 0
      %261 = vmatpush.msra.mxu0 0.0
      %262 = vmatpush.msra.mxu0 0.0
      %263 = vmatpush.msra.mxu0 0.0
      %264 = vmatpush.msra.mxu0 0.0
      %265 = vmatpush.msra.mxu0 0.0
      %266 = vmatpush.msra.mxu0 0.0
      %267 = vmatpush.msra.mxu0 0.0
      %268 = vmatpush.msra.mxu0 0.0
      %269 = vmatpush.msra.mxu0 %v211
      %270 = vmatpush.msra.mxu0 %v210
      %271 = vmatpush.msra.mxu0 %v209
      %272 = vmatpush.msra.mxu0 %v208
      %273 = vmatpush.msra.mxu0 %v207
      %274 = vmatpush.msra.mxu0 %v206
      %275 = vmatpush.msra.mxu0 %v205
      %276 = vmatpush.msra.mxu0 %v204
      %277 = vmatmul.f32.gmra.mxu0 %v214
      %v278 = vpop.f32.mrf.mxu0
      %v279 = vadd.f32 0.0, %v278
      %280 = vmatmul.f32.gmra.mxu0 %v217
      %v281 = vpop.f32.mrf.mxu0
      %v282 = vadd.f32 0.0, %v281
      %283 = vmatmul.f32.gmra.mxu0 %v220
      %v284 = vpop.f32.mrf.mxu0
      %v285 = vadd.f32 0.0, %v284
      %286 = vmatmul.f32.gmra.mxu0 %v223
      %v287 = vpop.f32.mrf.mxu0
      %v288 = vadd.f32 0.0, %v287
      %289 = vmatmul.f32.gmra.mxu0 %v226
      %v290 = vpop.f32.mrf.mxu0
      %v291 = vadd.f32 0.0, %v290
      %292 = vmatmul.f32.gmra.mxu0 %v229
      %v293 = vpop.f32.mrf.mxu0
      %v294 = vadd.f32 0.0, %v293
      %295 = vmatmul.f32.gmra.mxu0 %v232
      %v296 = vpop.f32.mrf.mxu0
      %v297 = vadd.f32 0.0, %v296
      %298 = vmatmul.f32.gmra.mxu0 %v235
      %v299 = vpop.f32.mrf.mxu0
      %v300 = vadd.f32 0.0, %v299
      %301 = vmatmul.f32.gmra.mxu0 %v238
      %v302 = vpop.f32.mrf.mxu0
      %v303 = vadd.f32 0.0, %v302
      %304 = vmatmul.f32.gmra.mxu0 %v241
      %v305 = vpop.f32.mrf.mxu0
      %v306 = vadd.f32 0.0, %v305
      %307 = vmatmul.f32.gmra.mxu0 %v244
      %v308 = vpop.f32.mrf.mxu0
      %v309 = vadd.f32 0.0, %v308
      %310 = vmatmul.f32.gmra.mxu0 %v247
      %v311 = vpop.f32.mrf.mxu0
      %v312 = vadd.f32 0.0, %v311
      %313 = vmatmul.f32.gmra.mxu0 %v250
      %v314 = vpop.f32.mrf.mxu0
      %v315 = vadd.f32 0.0, %v314
      %316 = vmatmul.f32.gmra.mxu0 %v253
      %v317 = vpop.f32.mrf.mxu0
      %v318 = vadd.f32 0.0, %v317
      %319 = vmatmul.f32.gmra.mxu0 %v256
      %v320 = vpop.f32.mrf.mxu0
      %v321 = vadd.f32 0.0, %v320
      %322 = vmatmul.f32.gmra.mxu0 %v259
      %v323 = vpop.f32.mrf.mxu0
      %v324 = vadd.f32 0.0, %v323
      %325 = vdwg.mxu0
      %326 = vst [vmem:[%s180] sm:$0xff] %v279
      %327 = vst [vmem:[%s180 + $0x8] sm:$0xff] %v282
      %328 = vst [vmem:[%s180 + $0x10] sm:$0xff] %v285
      %329 = vst [vmem:[%s180 + $0x18] sm:$0xff] %v288
      %330 = vst [vmem:[%s180 + $0x20] sm:$0xff] %v291
      %331 = vst [vmem:[%s180 + $0x28] sm:$0xff] %v294
      %332 = vst [vmem:[%s180 + $0x30] sm:$0xff] %v297
      %333 = vst [vmem:[%s180 + $0x38] sm:$0xff] %v300
      %334 = vst [vmem:[%s180 + $0x40] sm:$0xff] %v303
      %335 = vst [vmem:[%s180 + $0x48] sm:$0xff] %v306
      %336 = vst [vmem:[%s180 + $0x50] sm:$0xff] %v309
      %337 = vst [vmem:[%s180 + $0x58] sm:$0xff] %v312
      %338 = vst [vmem:[%s180 + $0x60] sm:$0xff] %v315
      %339 = vst [vmem:[%s180 + $0x68] sm:$0xff] %v318
      %340 = vst [vmem:[%s180 + $0x70] sm:$0xff] %v321
      %341 = vst [vmem:[%s180 + $0x78] sm:$0xff] %v324
      %v342 = vpack.c.bf16 %v279, %v279
      %v343 = vpack.c.bf16 %v282, %v282
      %v344 = vpack.c.bf16 %v285, %v285
      %v345 = vpack.c.bf16 %v288, %v288
      %v346 = vpack.c.bf16 %v291, %v291
      %v347 = vpack.c.bf16 %v294, %v294
      %v348 = vpack.c.bf16 %v297, %v297
      %v349 = vpack.c.bf16 %v300, %v300
      %v350 = vpack.c.bf16 %v303, %v303
      %v351 = vpack.c.bf16 %v306, %v306
      %v352 = vpack.c.bf16 %v309, %v309
      %v353 = vpack.c.bf16 %v312, %v312
      %v354 = vpack.c.bf16 %v315, %v315
      %v355 = vpack.c.bf16 %v318, %v318
      %v356 = vpack.c.bf16 %v321, %v321
      %v357 = vpack.c.bf16 %v324, %v324
      %358 = vst [vmem:[%s186] sm:$0xf] %v342
      %359 = vst [vmem:[%s186 + $0x4] sm:$0xf] %v343
      %360 = vst [vmem:[%s186 + $0x8] sm:$0xf] %v344
      %361 = vst [vmem:[%s186 + $0xc] sm:$0xf] %v345
      %362 = vst [vmem:[%s186 + $0x10] sm:$0xf] %v346
      %363 = vst [vmem:[%s186 + $0x14] sm:$0xf] %v347
      %364 = vst [vmem:[%s186 + $0x18] sm:$0xf] %v348
      %365 = vst [vmem:[%s186 + $0x1c] sm:$0xf] %v349
      %366 = vst [vmem:[%s186 + $0x20] sm:$0xf] %v350
      %367 = vst [vmem:[%s186 + $0x24] sm:$0xf] %v351
      %368 = vst [vmem:[%s186 + $0x28] sm:$0xf] %v352
      %369 = vst [vmem:[%s186 + $0x2c] sm:$0xf] %v353
      %370 = vst [vmem:[%s186 + $0x30] sm:$0xf] %v354
      %371 = vst [vmem:[%s186 + $0x34] sm:$0xf] %v355
      %372 = vst [vmem:[%s186 + $0x38] sm:$0xf] %v356
      %373 = vst [vmem:[%s186 + $0x3c] sm:$0xf] %v357
      %s374 = smul.u32 16, %s15
      %p375 = scmp.lt.s32.totalorder %s374, 47
      %s376 = scalar_select %p375, %s374, 47
      %s377 = smul.addr %s376, 8
      %s378 = scalar_lea.vmem %s2, %s377
      %s379 = smul.u32 16, %s15
      %p380 = scmp.lt.s32.totalorder %s379, 47
      %s381 = scalar_select %p380, %s379, 47
      %s382 = smul.addr %s381, 4
      %s383 = scalar_lea.vmem %s3, %s382
      // Predicated region
      $region29: #{fame_forward.3} parent=27 // pred_check
        %p384 = pneg %p80
      $region30: #{fame_forward.3} parent=27 // pred_check_branch
        %386 = sbr.rel (%p384) target = $region32
      $region31: #{fame_forward.3} parent=27 // pred_region
        %s387 = smul.u32 16, %s15
      $region32: #{fame_forward.3} parent=27 // pred_fallthru
        _
      // Predicated region
      $region33: #{fame_forward.3} parent=27 // pred_check
        %p388 = pneg %p106
      $region34: #{fame_forward.3} parent=27 // pred_check_branch
        %390 = sbr.rel (%p388) target = $region36
      $region35: #{fame_forward.3} parent=27 // pred_region
        %s391 = smul.u32 16, %s15
      $region36: #{fame_forward.3} parent=27 // pred_fallthru
        _
    $region28: #{fame_forward.3} parent=5 // pred_fallthru
      _
    %p392 = scmp.le.s32.totalorder 2, %s10
    // Predicated region
    $region37: #{fame_forward.3} parent=5 // pred_check
      %p393 = pneg %p392
    $region38: #{fame_forward.3} parent=5 // pred_check_branch
      %395 = sbr.rel (%p393) target = $region40
    $region39: #{fame_forward.3} parent=5 // pred_region
      %s396 = ssub.s32 %s10, 2
      // Predicated region
      $region41: #{fame_forward.3} parent=39 // pred_check
        %p397 = pneg %p86
      $region42: #{fame_forward.3} parent=39 // pred_check_branch
        %399 = sbr.rel (%p397) target = $region44
      $region43: #{fame_forward.3} parent=39 // pred_region
        %s400 = smul.u32 16, %s16
        %p401 = scmp.lt.s32.totalorder %s400, 47
        %s402 = scalar_select %p401, %s400, 47
        %s403 = smul.addr %s402, 8
        %s404 = scalar_lea.vmem %s2, %s403
      $region44: #{fame_forward.3} parent=39 // pred_fallthru
        _
      // Predicated region
      $region45: #{fame_forward.3} parent=39 // pred_check
        %p405 = pneg %p112
      $region46: #{fame_forward.3} parent=39 // pred_check_branch
        %407 = sbr.rel (%p405) target = $region48
      $region47: #{fame_forward.3} parent=39 // pred_region
        %s408 = smul.u32 16, %s16
        %p409 = scmp.lt.s32.totalorder %s408, 47
        %s410 = scalar_select %p409, %s408, 47
        %s411 = smul.addr %s410, 4
        %s412 = scalar_lea.vmem %s3, %s411
      $region48: #{fame_forward.3} parent=39 // pred_fallthru
        _
    $region40: #{fame_forward.3} parent=5 // pred_fallthru
      _
  $region6: #{fame_forward.3} parent=0 // loop_footer
    %s14 = sadd.s32 1, %s10
  $region7: #{fame_forward.3} parent=0 // loop_footer_branch
    %9 = sbr.rel target = $region3
  $region8: #{fame_forward.3} parent=0 // loop_exit
    _

// kernel: fame_forward.4
$region0: #{fame_forward.4}
  #allocation0 [shape = 'u32[]', space=smem, size = 0x4, offset = 0x4, fixed_abs, tag = 'smem constant byte address 0x4 - core index']
  #allocation1 [shape = 'u32[72,128]{1,0:T(1,128)}', space=vmem, size = 0x9000, scoped, tag = 'internal scratch']
  #allocation2 [shape = 'f32[128,128]{1,0:T(8,128)}', space=vmem, size = 0x10000, scoped, tag = 'scratch operand']
  %s0 = inlined_call_operand.vmem [shape: f32[4], index: 0, kind: input, shape index: {}]
  %s1 = inlined_call_operand.vmem [shape: s8[4,384,384], index: 1, kind: input, shape index: {}]
  %s2 = inlined_call_operand.vmem [shape: bf16[384,128], index: 2, kind: input, shape index: {}]
  %s3 = inlined_call_operand.vmem [shape: bf16[384,384], index: 3, kind: output, shape index: {0}]
  %s4 = inlined_call_operand.vmem [shape: f32[384,128], index: 4, kind: output, shape index: {1}]
  %s5 = inlined_call_operand.vmem [shape: bf16[384,128], index: 5, kind: output, shape index: {2}]
  %6 = xla_tuple %s3, %s4, %s5
  %s7 = sld [smem:[#allocation0]]
  $region148: #{fame_forward.4} parent=0
    _
  %s9 = ssub.s32 1, %s7
  %s10 = scalar_select 0, %s9, %s7
  $region1: #{fame_forward.4} parent=0
    #allocation3 [shape = 'u8[512]{0}', space=smem, size = 0x200, scoped, tag = 'input window, operand 0, single buffered']
    #allocation4 [shape = 's32[2]{0}', space=sflag, size = 0x8, scoped, tag = 'scoped memory for fame_forward.4']
    #allocation5 [shape = 'u8[131072]{0}', space=vmem, size = 0x20000, scoped, tag = 'input window, operand 1']
    #allocation6 [shape = 'u8[65536]{0}', space=vmem, size = 0x10000, scoped, tag = 'output window, operand 0']
    %11 = vsyncpa [#allocation4], 0
    loop: start=0, step=1, limit=11
    $region2: #{fame_forward.4} parent=1 // loop_pre_header
      _
    $region3: #{fame_forward.4} parent=1 // loop_header
      %s13 = sphi 0, %s17
      %p14 = scmp.ge.s32.totalorder %s13, 11
      %s20 = sphi 0, %s32
      %s21 = sphi 0, %s28
      %s22 = sphi 0, %s20
      %s23 = sphi 0, %s21
      %s24 = sphi 0, %s22
      %s25 = sphi 0, %s23
      %s33 = sphi 0, %s33
      %s35 = sphi 0, %s33
      %s36 = sphi 0, %s35
      %s50 = sphi 0, %s36
      %s58 = sphi 0, %s60
      %s61 = sphi 0, %s58
      %s62 = sphi 0, %s61
      %s78 = sphi 0, %s62
      %s82 = sphi 0, %s82
      %s84 = sphi 0, %s82
      %s85 = sphi 0, %s84
      %s99 = sphi 0, %s85
      %s107 = sphi 0, %s109
      %s110 = sphi 0, %s107
      %s111 = sphi 0, %s110
      %s127 = sphi 0, %s111
      %s133 = sphi 0, %s135
      %s136 = sphi 0, %s133
      %s137 = sphi 0, %s136
      %s153 = sphi 0, %s137
      %s159 = sphi 0, %s161
      %s162 = sphi 0, %s159
      %s163 = sphi 0, %s162
      %s179 = sphi 0, %s163
    $region4: #{fame_forward.4} parent=1 // loop_header_branch
      %16 = sbr.rel (%p14) target = $region8
    $region5: #{fame_forward.4} parent=1 // loop_body
      %s18 = ssub.s32 %s13, 1
      %s19 = ssub.s32 %s13, 2
      %s26 = sadd.s32 1, %s21
      %p27 = scmp.ge.s32.totalorder %s26, 3
      %s28 = scalar_select %p27, 0, %s26
      %s29 = sadd.s32 1, %s20
      %s30 = scalar_select %p27, %s29, %s20
      %p31 = scmp.ge.s32.totalorder %s30, 3
      %s32 = scalar_select %p31, 0, %s30
      %s34 = sadd.s32 %s33, 1
      %p37 = scmp.eq.s32.totalorder %s13, 8
      %p38 = scmp.ne.s32.totalorder %s33, %s35
      %p39 = scmp.eq.s32.totalorder %s13, 0
      %p40 = por %p38, %p39
      %p41 = scmp.ne.s32.totalorder %s33, %s35
      %p42 = scmp.eq.s32.totalorder %s18, 8
      %p43 = por %p41, %p42
      %p44 = scmp.ne.s32.totalorder %s35, %s36
      %p45 = scmp.eq.s32.totalorder %s18, 0
      %p46 = por %p44, %p45
      %p47 = scmp.ne.s32.totalorder %s35, %s36
      %p48 = scmp.eq.s32.totalorder %s19, 8
      %p49 = por %p47, %p48
      %p51 = scmp.ne.s32.totalorder %s36, %s50
      %p52 = scmp.eq.s32.totalorder %s19, 0
      %p53 = por %p51, %p52
      %s54 = ssub.s32 %s20, %s32
      %s55 = ssub.s32 %s21, %s28
      %s56 = sor.u32 %s54, %s55
      %p57 = scmp.eq.s32.totalorder %s56, 0
      %s59 = sadd.s32 %s58, 1
      %s60 = scalar_select %p57, %s58, %s59
      %p63 = pneg %p57
      %p64 = scmp.eq.s32.totalorder %s13, 8
      %p65 = por %p63, %p64
      %p66 = scmp.ne.s32.totalorder %s58, %s61
      %p67 = scmp.eq.s32.totalorder %s13, 0
      %p68 = por %p66, %p67
      %p69 = scmp.ne.s32.totalorder %s58, %s61
      %p70 = scmp.eq.s32.totalorder %s18, 8
      %p71 = por %p69, %p70
      %p72 = scmp.ne.s32.totalorder %s61, %s62
      %p73 = scmp.eq.s32.totalorder %s18, 0
      %p74 = por %p72, %p73
      %p75 = scmp.ne.s32.totalorder %s61, %s62
      %p76 = scmp.eq.s32.totalorder %s19, 8
      %p77 = por %p75, %p76
      %p79 = scmp.ne.s32.totalorder %s62, %s78
      %p80 = scmp.eq.s32.totalorder %s19, 0
      %p81 = por %p79, %p80
      %s83 = sadd.s32 %s82, 1
      %p86 = scmp.eq.s32.totalorder %s13, 8
      %p87 = scmp.ne.s32.totalorder %s82, %s84
      %p88 = scmp.eq.s32.totalorder %s13, 0
      %p89 = por %p87, %p88
      %p90 = scmp.ne.s32.totalorder %s82, %s84
      %p91 = scmp.eq.s32.totalorder %s18, 8
      %p92 = por %p90, %p91
      %p93 = scmp.ne.s32.totalorder %s84, %s85
      %p94 = scmp.eq.s32.totalorder %s18, 0
      %p95 = por %p93, %p94
      %p96 = scmp.ne.s32.totalorder %s84, %s85
      %p97 = scmp.eq.s32.totalorder %s19, 8
      %p98 = por %p96, %p97
      %p100 = scmp.ne.s32.totalorder %s85, %s99
      %p101 = scmp.eq.s32.totalorder %s19, 0
      %p102 = por %p100, %p101
      %s103 = ssub.s32 %s20, %s32
      %s104 = ssub.s32 %s21, %s28
      %s105 = sor.u32 %s103, %s104
      %p106 = scmp.eq.s32.totalorder %s105, 0
      %s108 = sadd.s32 %s107, 1
      %s109 = scalar_select %p106, %s107, %s108
      %p112 = pneg %p106
      %p113 = scmp.eq.s32.totalorder %s13, 8
      %p114 = por %p112, %p113
      %p115 = scmp.ne.s32.totalorder %s107, %s110
      %p116 = scmp.eq.s32.totalorder %s13, 0
      %p117 = por %p115, %p116
      %p118 = scmp.ne.s32.totalorder %s107, %s110
      %p119 = scmp.eq.s32.totalorder %s18, 8
      %p120 = por %p118, %p119
      %p121 = scmp.ne.s32.totalorder %s110, %s111
      %p122 = scmp.eq.s32.totalorder %s18, 0
      %p123 = por %p121, %p122
      %p124 = scmp.ne.s32.totalorder %s110, %s111
      %p125 = scmp.eq.s32.totalorder %s19, 8
      %p126 = por %p124, %p125
      %p128 = scmp.ne.s32.totalorder %s111, %s127
      %p129 = scmp.eq.s32.totalorder %s19, 0
      %p130 = por %p128, %p129
      %s131 = ssub.s32 %s20, %s32
      %p132 = scmp.eq.s32.totalorder %s131, 0
      %s134 = sadd.s32 %s133, 1
      %s135 = scalar_select %p132, %s133, %s134
      %p138 = pneg %p132
      %p139 = scmp.eq.s32.totalorder %s13, 8
      %p140 = por %p138, %p139
      %p141 = scmp.ne.s32.totalorder %s133, %s136
      %p142 = scmp.eq.s32.totalorder %s13, 0
      %p143 = por %p141, %p142
      %p144 = scmp.ne.s32.totalorder %s133, %s136
      %p145 = scmp.eq.s32.totalorder %s18, 8
      %p146 = por %p144, %p145
      %p147 = scmp.ne.s32.totalorder %s136, %s137
      %p148 = scmp.eq.s32.totalorder %s18, 0
      %p149 = por %p147, %p148
      %p150 = scmp.ne.s32.totalorder %s136, %s137
      %p151 = scmp.eq.s32.totalorder %s19, 8
      %p152 = por %p150, %p151
      %p154 = scmp.ne.s32.totalorder %s137, %s153
      %p155 = scmp.eq.s32.totalorder %s19, 0
      %p156 = por %p154, %p155
      %s157 = ssub.s32 %s20, %s32
      %p158 = scmp.eq.s32.totalorder %s157, 0
      %s160 = sadd.s32 %s159, 1
      %s161 = scalar_select %p158, %s159, %s160
      %p164 = pneg %p158
      %p165 = scmp.eq.s32.totalorder %s13, 8
      %p166 = por %p164, %p165
      %p167 = scmp.ne.s32.totalorder %s159, %s162
      %p168 = scmp.eq.s32.totalorder %s13, 0
      %p169 = por %p167, %p168
      %p170 = scmp.ne.s32.totalorder %s159, %s162
      %p171 = scmp.eq.s32.totalorder %s18, 8
      %p172 = por %p170, %p171
      %p173 = scmp.ne.s32.totalorder %s162, %s163
      %p174 = scmp.eq.s32.totalorder %s18, 0
      %p175 = por %p173, %p174
      %p176 = scmp.ne.s32.totalorder %s162, %s163
      %p177 = scmp.eq.s32.totalorder %s19, 8
      %p178 = por %p176, %p177
      %p180 = scmp.ne.s32.totalorder %s163, %s179
      %p181 = scmp.eq.s32.totalorder %s19, 0
      %p182 = por %p180, %p181
      %p183 = scmp.le.s32.totalorder 1, %s13
      %p184 = scmp.lt.s32.totalorder %s13, 10
      %p185 = pnand %p183, %p184
      %p186 = pneg %p185
      // Predicated region
      $region9: #{fame_forward.4} parent=5 // pred_check
        _
      $region10: #{fame_forward.4} parent=5 // pred_check_branch
        %188 = sbr.rel (%p185) target = $region12
      $region11: #{fame_forward.4} parent=5 // pred_region
        %s189 = ssub.s32 %s13, 1
        // Predicated region
        $region13: #{fame_forward.4} parent=11 // pred_check
          %p190 = pneg %p46
        $region14: #{fame_forward.4} parent=11 // pred_check_branch
          %192 = sbr.rel (%p190) target = $region16
        $region15: #{fame_forward.4} parent=11 // pred_region
          %194 = vsyncadd [#allocation4], 0
          %s196 = sshll.u32 %s0, 4
          %s197 = int_to_ptr.vmem [resolvable:$true] %s196
          %199 = dma.vmem_to_smem %s197, 16, [#allocation3], [#allocation4]
        $region16: #{fame_forward.4} parent=11 // pred_fallthru
          _
        // Predicated region
        $region17: #{fame_forward.4} parent=11 // pred_check
          %p200 = pneg %p95
        $region18: #{fame_forward.4} parent=11 // pred_check_branch
          %202 = sbr.rel (%p200) target = $region20
        $region19: #{fame_forward.4} parent=11 // pred_region
          _
        $region20: #{fame_forward.4} parent=11 // pred_fallthru
          _
      $region12: #{fame_forward.4} parent=5 // pred_fallthru
        _
      %p203 = scmp.lt.s32.totalorder %s13, 9
      // Predicated region
      $region21: #{fame_forward.4} parent=5 // pred_check
        %p204 = pneg %p203
      $region22: #{fame_forward.4} parent=5 // pred_check_branch
        %206 = sbr.rel (%p204) target = $region24
      $region23: #{fame_forward.4} parent=5 // pred_region
        // Predicated region
        $region25: #{fame_forward.4} parent=23 // pred_check
          %p207 = pneg %p68
        $region26: #{fame_forward.4} parent=23 // pred_check_branch
          %209 = sbr.rel (%p207) target = $region28
        $region27: #{fame_forward.4} parent=23 // pred_region
          %s210 = sand.u32 %s58, 1
          %s211 = sand.u32 %s58, 1
          %s212 = smul.addr %s211, 128
          %s213 = scalar_lea.vmem [#allocation5], %s212
          %s214 = smul.u32 4, %s20
          %s215 = smul.addr %s214, 3
          %s216 = sadd.s32 %s21, %s215
          %s217 = smul.addr %s216, 8
          %s218 = scalar_lea.vmem %s1, %s217
          // Predicated region
          $region29: #{fame_forward.4} parent=27 // pred_check
            _
          $region30: #{fame_forward.4} parent=27 // pred_check_branch
            %220 = sbr.rel (0) target = $region32
          $region31: #{fame_forward.4} parent=27 // pred_region
            // Predicated region
            $region33: #{fame_forward.4} parent=31 // pred_check
              _
            $region34: #{fame_forward.4} parent=31 // pred_check_branch
              %222 = sbr.rel (0) target = $region36
            $region35: #{fame_forward.4} parent=31 // pred_region
              // Predicated region
              $region48: #{fame_forward.4} parent=35 // pred_check
                _
              $region49: #{fame_forward.4} parent=35 // pred_check_branch
                %268 = sbr.rel (0) target = $region51
              $region50: #{fame_forward.4} parent=35 // pred_region
                loop: start=0, step=1, limit=1
                $region52: #{fame_forward.4} parent=50 // loop_pre_header
                  _
                $region53: #{fame_forward.4} parent=50 // loop_header
                  %s270 = sphi 0, %s274
                  %p271 = scmp.ge.s32.totalorder %s270, 1
                  %s275 = sphi %s218, %s218
                  %s276 = sphi %s213, %s213
                $region54: #{fame_forward.4} parent=50 // loop_header_branch
                  %273 = sbr.rel (%p271) target = $region58
                $region55: #{fame_forward.4} parent=50 // loop_body
                  %v277 = vld [vmem:[%s275] sm:$0xff]
                  %278 = vst [vmem:[%s276] sm:$0xff] %v277
                  %v279 = vld [vmem:[%s275 + $0x18] sm:$0xff]
                  %280 = vst [vmem:[%s276 + $0x8] sm:$0xff] %v279
                  %v281 = vld [vmem:[%s275 + $0x30] sm:$0xff]
                  %282 = vst [vmem:[%s276 + $0x10] sm:$0xff] %v281
                  %v283 = vld [vmem:[%s275 + $0x48] sm:$0xff]
                  %284 = vst [vmem:[%s276 + $0x18] sm:$0xff] %v283
                  %v285 = vld [vmem:[%s275 + $0x120] sm:$0xff]
                  %286 = vst [vmem:[%s276 + $0x20] sm:$0xff] %v285
                  %v287 = vld [vmem:[%s275 + $0x138] sm:$0xff]
                  %288 = vst [vmem:[%s276 + $0x28] sm:$0xff] %v287
                  %v289 = vld [vmem:[%s275 + $0x150] sm:$0xff]
                  %290 = vst [vmem:[%s276 + $0x30] sm:$0xff] %v289
                  %v291 = vld [vmem:[%s275 + $0x168] sm:$0xff]
                  %292 = vst [vmem:[%s276 + $0x38] sm:$0xff] %v291
                  %v293 = vld [vmem:[%s275 + $0x240] sm:$0xff]
                  %294 = vst [vmem:[%s276 + $0x40] sm:$0xff] %v293
                  %v295 = vld [vmem:[%s275 + $0x258] sm:$0xff]
                  %296 = vst [vmem:[%s276 + $0x48] sm:$0xff] %v295
                  %v297 = vld [vmem:[%s275 + $0x270] sm:$0xff]
                  %298 = vst [vmem:[%s276 + $0x50] sm:$0xff] %v297
                  %v299 = vld [vmem:[%s275 + $0x288] sm:$0xff]
                  %300 = vst [vmem:[%s276 + $0x58] sm:$0xff] %v299
                  %v301 = vld [vmem:[%s275 + $0x360] sm:$0xff]
                  %302 = vst [vmem:[%s276 + $0x60] sm:$0xff] %v301
                  %v303 = vld [vmem:[%s275 + $0x378] sm:$0xff]
                  %304 = vst [vmem:[%s276 + $0x68] sm:$0xff] %v303
                  %v305 = vld [vmem:[%s275 + $0x390] sm:$0xff]
                  %306 = vst [vmem:[%s276 + $0x70] sm:$0xff] %v305
                  %v307 = vld [vmem:[%s275 + $0x3a8] sm:$0xff]
                  %308 = vst [vmem:[%s276 + $0x78] sm:$0xff] %v307
                $region56: #{fame_forward.4} parent=50 // loop_footer
                  %s274 = sadd.s32 1, %s270
                $region57: #{fame_forward.4} parent=50 // loop_footer_branch
                  %269 = sbr.rel target = $region53
                $region58: #{fame_forward.4} parent=50 // loop_exit
                  _
              $region51: #{fame_forward.4} parent=35 // pred_fallthru
                _
              // Predicated region
              $region59: #{fame_forward.4} parent=35 // pred_check
                _
              $region60: #{fame_forward.4} parent=35 // pred_check_branch
                %310 = sbr.rel target = $region62
              $region61: #{fame_forward.4} parent=35 // pred_region
                _
              $region62: #{fame_forward.4} parent=35 // pred_fallthru
                _
            $region36: #{fame_forward.4} parent=31 // pred_fallthru
              _
            // Predicated region
            $region37: #{fame_forward.4} parent=31 // pred_check
              _
            $region38: #{fame_forward.4} parent=31 // pred_check_branch
              %224 = sbr.rel target = $region40
            $region39: #{fame_forward.4} parent=31 // pred_region
              %s226 = ssub.s32 256, 1
              loop: start=0, step=1, limit=1
              $region41: #{fame_forward.4} parent=39 // loop_pre_header
                _
              $region42: #{fame_forward.4} parent=39 // loop_header
                %s228 = sphi 0, %s232
                %p229 = scmp.ge.s32.totalorder %s228, 1
                %s233 = sphi %s218, %s218
                %s234 = sphi %s213, %s213
              $region43: #{fame_forward.4} parent=39 // loop_header_branch
                %231 = sbr.rel (%p229) target = $region47
              $region44: #{fame_forward.4} parent=39 // loop_body
                %v235 = vld [vmem:[%s233] sm:%s226]
                %236 = vst [vmem:[%s234] sm:%s226] %v235
                %v237 = vld [vmem:[%s233 + $0x18] sm:%s226]
                %238 = vst [vmem:[%s234 + $0x8] sm:%s226] %v237
                %v239 = vld [vmem:[%s233 + $0x30] sm:%s226]
                %240 = vst [vmem:[%s234 + $0x10] sm:%s226] %v239
                %v241 = vld [vmem:[%s233 + $0x48] sm:%s226]
                %242 = vst [vmem:[%s234 + $0x18] sm:%s226] %v241
                %v243 = vld [vmem:[%s233 + $0x120] sm:%s226]
                %244 = vst [vmem:[%s234 + $0x20] sm:%s226] %v243
                %v245 = vld [vmem:[%s233 + $0x138] sm:%s226]
                %246 = vst [vmem:[%s234 + $0x28] sm:%s226] %v245
                %v247 = vld [vmem:[%s233 + $0x150] sm:%s226]
                %248 = vst [vmem:[%s234 + $0x30] sm:%s226] %v247
                %v249 = vld [vmem:[%s233 + $0x168] sm:%s226]
                %250 = vst [vmem:[%s234 + $0x38] sm:%s226] %v249
                %v251 = vld [vmem:[%s233 + $0x240] sm:%s226]
                %252 = vst [vmem:[%s234 + $0x40] sm:%s226] %v251
                %v253 = vld [vmem:[%s233 + $0x258] sm:%s226]
                %254 = vst [vmem:[%s234 + $0x48] sm:%s226] %v253
                %v255 = vld [vmem:[%s233 + $0x270] sm:%s226]
                %256 = vst [vmem:[%s234 + $0x50] sm:%s226] %v255
                %v257 = vld [vmem:[%s233 + $0x288] sm:%s226]
                %258 = vst [vmem:[%s234 + $0x58] sm:%s226] %v257
                %v259 = vld [vmem:[%s233 + $0x360] sm:%s226]
                %260 = vst [vmem:[%s234 + $0x60] sm:%s226] %v259
                %v261 = vld [vmem:[%s233 + $0x378] sm:%s226]
                %262 = vst [vmem:[%s234 + $0x68] sm:%s226] %v261
                %v263 = vld [vmem:[%s233 + $0x390] sm:%s226]
                %264 = vst [vmem:[%s234 + $0x70] sm:%s226] %v263
                %v265 = vld [vmem:[%s233 + $0x3a8] sm:%s226]
                %266 = vst [vmem:[%s234 + $0x78] sm:%s226] %v265
              $region45: #{fame_forward.4} parent=39 // loop_footer
                %s232 = sadd.s32 1, %s228
              $region46: #{fame_forward.4} parent=39 // loop_footer_branch
                %227 = sbr.rel target = $region42
              $region47: #{fame_forward.4} parent=39 // loop_exit
                _
            $region40: #{fame_forward.4} parent=31 // pred_fallthru
              _
          $region32: #{fame_forward.4} parent=27 // pred_fallthru
            _
          %311 = vnop
        $region28: #{fame_forward.4} parent=23 // pred_fallthru
          _
      $region24: #{fame_forward.4} parent=5 // pred_fallthru
        _
      %p312 = scmp.le.s32.totalorder 1, %s13
      %p313 = scmp.lt.s32.totalorder %s13, 10
      %p314 = pnand %p312, %p313
      %p315 = pneg %p314
      // Predicated region
      $region63: #{fame_forward.4} parent=5 // pred_check
        _
      $region64: #{fame_forward.4} parent=5 // pred_check_branch
        %317 = sbr.rel (%p314) target = $region66
      $region65: #{fame_forward.4} parent=5 // pred_region
        %s318 = ssub.s32 %s13, 1
        // Predicated region
        $region67: #{fame_forward.4} parent=65 // pred_check
          %p319 = pneg %p46
        $region68: #{fame_forward.4} parent=65 // pred_check_branch
          %321 = sbr.rel (%p319) target = $region70
        $region69: #{fame_forward.4} parent=65 // pred_region
          %323 = dma.done [#allocation4], 16
        $region70: #{fame_forward.4} parent=65 // pred_fallthru
          _
        %s324 = sand.u32 %s61, 1
        %s325 = sand.u32 %s61, 1
        %s326 = smul.addr %s325, 128
        %s327 = scalar_lea.vmem [#allocation5], %s326
        // Predicated region
        $region71: #{fame_forward.4} parent=65 // pred_check
          %p328 = pneg %p74
        $region72: #{fame_forward.4} parent=65 // pred_check_branch
          %330 = sbr.rel (%p328) target = $region74
        $region73: #{fame_forward.4} parent=65 // pred_region
          _
        $region74: #{fame_forward.4} parent=65 // pred_fallthru
          _
        %331 = sfence
        %p332 = pneg %p46
        %p333 = pneg %p43
        %s334 = sand.u32 %s61, 1
        %s335 = sand.u32 %s61, 1
        %s336 = smul.addr %s335, 128
        %s337 = scalar_lea.vmem [#allocation5], %s336
        %p338 = pneg %p74
        %p339 = pneg %p71
        %p340 = pneg %p95
        %p341 = pneg %p92
        %p342 = pneg %p123
        %p343 = pneg %p120
        %s344 = sand.u32 %s110, 1
        %s345 = sand.u32 %s110, 1
        %s346 = smul.addr %s345, 64
        %s347 = scalar_lea.vmem [#allocation6], %s346
        %p348 = pneg %p149
        %p349 = pneg %p146
        %s350 = smul.u32 16, %s22
        %p351 = scmp.lt.s32.totalorder %s350, 47
        %s352 = scalar_select %p351, %s350, 47
        %s353 = smul.addr %s352, 8
        %s354 = scalar_lea.vmem %s4, %s353
        %p355 = pneg %p175
        %p356 = pneg %p172
        %s357 = smul.u32 16, %s22
        %p358 = scmp.lt.s32.totalorder %s357, 47
        %s359 = scalar_select %p358, %s357, 47
        %s360 = smul.addr %s359, 4
        %s361 = scalar_lea.vmem %s5, %s360
        %s362 = smul.u32 4, %s22
        %s363 = smul.u32 16, %s22
        %s364 = smul.u32 16, %s22
        %p365 = scmp.lt.s32.totalorder %s364, 47
        %s366 = scalar_select %p365, %s364, 47
        %s367 = smul.addr %s366, 8
        %s368 = scalar_lea.vmem %s4, %s367
        %s369 = smul.u32 16, %s22
        %s370 = smul.u32 16, %s22
        %p371 = scmp.lt.s32.totalorder %s370, 47
        %s372 = scalar_select %p371, %s370, 47
        %s373 = smul.addr %s372, 4
        %s374 = scalar_lea.vmem %s5, %s373
        %s375 = smul.u32 16, %s22
        %p376 = scmp.eq.s32.totalorder %s23, 0
        // Predicated region
        $region75: #{fame_forward.4} parent=65 // pred_check
          %p377 = pneg %p376
        $region76: #{fame_forward.4} parent=65 // pred_check_branch
          %379 = sbr.rel (%p377) target = $region78
        $region77: #{fame_forward.4} parent=65 // pred_region
          %380 = vst [vmem:[#allocation2] sm:$0xff] 0.0
          %381 = vst [vmem:[#allocation2 + $0x8] sm:$0xff] 0.0
          %382 = vst [vmem:[#allocation2 + $0x10] sm:$0xff] 0.0
          %383 = vst [vmem:[#allocation2 + $0x18] sm:$0xff] 0.0
          %384 = vst [vmem:[#allocation2 + $0x20] sm:$0xff] 0.0
          %385 = vst [vmem:[#allocation2 + $0x28] sm:$0xff] 0.0
          %386 = vst [vmem:[#allocation2 + $0x30] sm:$0xff] 0.0
          %387 = vst [vmem:[#allocation2 + $0x38] sm:$0xff] 0.0
          %388 = vst [vmem:[#allocation2 + $0x40] sm:$0xff] 0.0
          %389 = vst [vmem:[#allocation2 + $0x48] sm:$0xff] 0.0
          %390 = vst [vmem:[#allocation2 + $0x50] sm:$0xff] 0.0
          %391 = vst [vmem:[#allocation2 + $0x58] sm:$0xff] 0.0
          %392 = vst [vmem:[#allocation2 + $0x60] sm:$0xff] 0.0
          %393 = vst [vmem:[#allocation2 + $0x68] sm:$0xff] 0.0
          %394 = vst [vmem:[#allocation2 + $0x70] sm:$0xff] 0.0
          %395 = vst [vmem:[#allocation2 + $0x78] sm:$0xff] 0.0
        $region78: #{fame_forward.4} parent=65 // pred_fallthru
          _
        %s396 = sld [smem:[#allocation3]]
        %v397 = vld [vmem:[%s327] sm:$0xff]
        %v398 = vld [vmem:[%s327 + $0x8] sm:$0xff]
        %v399 = vld [vmem:[%s327 + $0x10] sm:$0xff]
        %v400 = vld [vmem:[%s327 + $0x18] sm:$0xff]
        %v401 = vunpack.c.0.s8 %v397
        %v402 = vunpack.c.1.s8 %v397
        %v403 = vunpack.c.2.s8 %v397
        %v404 = vunpack.c.3.s8 %v397
        %v405 = vunpack.c.0.s8 %v398
        %v406 = vunpack.c.1.s8 %v398
        %v407 = vunpack.c.2.s8 %v398
        %v408 = vunpack.c.3.s8 %v398
        %v409 = vunpack.c.0.s8 %v399
        %v410 = vunpack.c.1.s8 %v399
        %v411 = vunpack.c.2.s8 %v399
        %v412 = vunpack.c.3.s8 %v399
        %v413 = vunpack.c.0.s8 %v400
        %v414 = vunpack.c.1.s8 %v400
        %v415 = vunpack.c.2.s8 %v400
        %v416 = vunpack.c.3.s8 %v400
        %v417 = vcvt.s32.f32 %v401
        %v418 = vcvt.s32.f32 %v402
        %v419 = vcvt.s32.f32 %v403
        %v420 = vcvt.s32.f32 %v404
        %v421 = vcvt.s32.f32 %v405
        %v422 = vcvt.s32.f32 %v406
        %v423 = vcvt.s32.f32 %v407
        %v424 = vcvt.s32.f32 %v408
        %v425 = vcvt.s32.f32 %v409
        %v426 = vcvt.s32.f32 %v410
        %v427 = vcvt.s32.f32 %v411
        %v428 = vcvt.s32.f32 %v412
        %v429 = vcvt.s32.f32 %v413
        %v430 = vcvt.s32.f32 %v414
        %v431 = vcvt.s32.f32 %v415
        %v432 = vcvt.s32.f32 %v416
        %v433 = vstv %s396
        %v434 = vmul.f32 %v433, %v417
        %v435 = vmul.f32 %v433, %v418
        %v436 = vmul.f32 %v433, %v419
        %v437 = vmul.f32 %v433, %v420
        %v438 = vmul.f32 %v433, %v421
        %v439 = vmul.f32 %v433, %v422
        %v440 = vmul.f32 %v433, %v423
        %v441 = vmul.f32 %v433, %v424
        %v442 = vmul.f32 %v433, %v425
        %v443 = vmul.f32 %v433, %v426
        %v444 = vmul.f32 %v433, %v427
        %v445 = vmul.f32 %v433, %v428
        %v446 = vmul.f32 %v433, %v429
        %v447 = vmul.f32 %v433, %v430
        %v448 = vmul.f32 %v433, %v431
        %v449 = vmul.f32 %v433, %v432
        %s450 = sld [smem:[#allocation3 + $0x1]]
        %s451 = scalar_lea.vmem %s327, 32 [#allocation5]
        %v452 = vld [vmem:[%s451] sm:$0xff]
        %v453 = vld [vmem:[%s451 + $0x8] sm:$0xff]
        %v454 = vld [vmem:[%s451 + $0x10] sm:$0xff]
        %v455 = vld [vmem:[%s451 + $0x18] sm:$0xff]
        %v456 = vunpack.c.0.s8 %v452
        %v457 = vunpack.c.1.s8 %v452
        %v458 = vunpack.c.2.s8 %v452
        %v459 = vunpack.c.3.s8 %v452
        %v460 = vunpack.c.0.s8 %v453
        %v461 = vunpack.c.1.s8 %v453
        %v462 = vunpack.c.2.s8 %v453
        %v463 = vunpack.c.3.s8 %v453
        %v464 = vunpack.c.0.s8 %v454
        %v465 = vunpack.c.1.s8 %v454
        %v466 = vunpack.c.2.s8 %v454
        %v467 = vunpack.c.3.s8 %v454
        %v468 = vunpack.c.0.s8 %v455
        %v469 = vunpack.c.1.s8 %v455
        %v470 = vunpack.c.2.s8 %v455
        %v471 = vunpack.c.3.s8 %v455
        %v472 = vcvt.s32.f32 %v456
        %v473 = vcvt.s32.f32 %v457
        %v474 = vcvt.s32.f32 %v458
        %v475 = vcvt.s32.f32 %v459
        %v476 = vcvt.s32.f32 %v460
        %v477 = vcvt.s32.f32 %v461
        %v478 = vcvt.s32.f32 %v462
        %v479 = vcvt.s32.f32 %v463
        %v480 = vcvt.s32.f32 %v464
        %v481 = vcvt.s32.f32 %v465
        %v482 = vcvt.s32.f32 %v466
        %v483 = vcvt.s32.f32 %v467
        %v484 = vcvt.s32.f32 %v468
        %v485 = vcvt.s32.f32 %v469
        %v486 = vcvt.s32.f32 %v470
        %v487 = vcvt.s32.f32 %v471
        %v488 = vstv %s450
        %v489 = vmul.f32 %v488, %v472
        %v490 = vmul.f32 %v488, %v473
        %v491 = vmul.f32 %v488, %v474
        %v492 = vmul.f32 %v488, %v475
        %v493 = vmul.f32 %v488, %v476
        %v494 = vmul.f32 %v488, %v477
        %v495 = vmul.f32 %v488, %v478
        %v496 = vmul.f32 %v488, %v479
        %v497 = vmul.f32 %v488, %v480
        %v498 = vmul.f32 %v488, %v481
        %v499 = vmul.f32 %v488, %v482
        %v500 = vmul.f32 %v488, %v483
        %v501 = vmul.f32 %v488, %v484
        %v502 = vmul.f32 %v488, %v485
        %v503 = vmul.f32 %v488, %v486
        %v504 = vmul.f32 %v488, %v487
        %v505 = vadd.f32 %v434, %v489
        %v506 = vadd.f32 %v435, %v490
        %v507 = vadd.f32 %v436, %v491
        %v508 = vadd.f32 %v437, %v492
        %v509 = vadd.f32 %v438, %v493
        %v510 = vadd.f32 %v439, %v494
        %v511 = vadd.f32 %v440, %v495
        %v512 = vadd.f32 %v441, %v496
        %v513 = vadd.f32 %v442, %v497
        %v514 = vadd.f32 %v443, %v498
        %v515 = vadd.f32 %v444, %v499
        %v516 = vadd.f32 %v445, %v500
        %v517 = vadd.f32 %v446, %v501
        %v518 = vadd.f32 %v447, %v502
        %v519 = vadd.f32 %v448, %v503
        %v520 = vadd.f32 %v449, %v504
        %s521 = sld [smem:[#allocation3 + $0x2]]
        %s522 = scalar_lea.vmem %s327, 64 [#allocation5]
        %v523 = vld [vmem:[%s522] sm:$0xff]
        %v524 = vld [vmem:[%s522 + $0x8] sm:$0xff]
        %v525 = vld [vmem:[%s522 + $0x10] sm:$0xff]
        %v526 = vld [vmem:[%s522 + $0x18] sm:$0xff]
        %v527 = vunpack.c.0.s8 %v523
        %v528 = vunpack.c.1.s8 %v523
        %v529 = vunpack.c.2.s8 %v523
        %v530 = vunpack.c.3.s8 %v523
        %v531 = vunpack.c.0.s8 %v524
        %v532 = vunpack.c.1.s8 %v524
        %v533 = vunpack.c.2.s8 %v524
        %v534 = vunpack.c.3.s8 %v524
        %v535 = vunpack.c.0.s8 %v525
        %v536 = vunpack.c.1.s8 %v525
        %v537 = vunpack.c.2.s8 %v525
        %v538 = vunpack.c.3.s8 %v525
        %v539 = vunpack.c.0.s8 %v526
        %v540 = vunpack.c.1.s8 %v526
        %v541 = vunpack.c.2.s8 %v526
        %v542 = vunpack.c.3.s8 %v526
        %v543 = vcvt.s32.f32 %v527
        %v544 = vcvt.s32.f32 %v528
        %v545 = vcvt.s32.f32 %v529
        %v546 = vcvt.s32.f32 %v530
        %v547 = vcvt.s32.f32 %v531
        %v548 = vcvt.s32.f32 %v532
        %v549 = vcvt.s32.f32 %v533
        %v550 = vcvt.s32.f32 %v534
        %v551 = vcvt.s32.f32 %v535
        %v552 = vcvt.s32.f32 %v536
        %v553 = vcvt.s32.f32 %v537
        %v554 = vcvt.s32.f32 %v538
        %v555 = vcvt.s32.f32 %v539
        %v556 = vcvt.s32.f32 %v540
        %v557 = vcvt.s32.f32 %v541
        %v558 = vcvt.s32.f32 %v542
        %v559 = vstv %s521
        %v560 = vmul.f32 %v559, %v543
        %v561 = vmul.f32 %v559, %v544
        %v562 = vmul.f32 %v559, %v545
        %v563 = vmul.f32 %v559, %v546
        %v564 = vmul.f32 %v559, %v547
        %v565 = vmul.f32 %v559, %v548
        %v566 = vmul.f32 %v559, %v549
        %v567 = vmul.f32 %v559, %v550
        %v568 = vmul.f32 %v559, %v551
        %v569 = vmul.f32 %v559, %v552
        %v570 = vmul.f32 %v559, %v553
        %v571 = vmul.f32 %v559, %v554
        %v572 = vmul.f32 %v559, %v555
        %v573 = vmul.f32 %v559, %v556
        %v574 = vmul.f32 %v559, %v557
        %v575 = vmul.f32 %v559, %v558
        %v576 = vadd.f32 %v505, %v560
        %v577 = vadd.f32 %v506, %v561
        %v578 = vadd.f32 %v507, %v562
        %v579 = vadd.f32 %v508, %v563
        %v580 = vadd.f32 %v509, %v564
        %v581 = vadd.f32 %v510, %v565
        %v582 = vadd.f32 %v511, %v566
        %v583 = vadd.f32 %v512, %v567
        %v584 = vadd.f32 %v513, %v568
        %v585 = vadd.f32 %v514, %v569
        %v586 = vadd.f32 %v515, %v570
        %v587 = vadd.f32 %v516, %v571
        %v588 = vadd.f32 %v517, %v572
        %v589 = vadd.f32 %v518, %v573
        %v590 = vadd.f32 %v519, %v574
        %v591 = vadd.f32 %v520, %v575
        %s592 = sld [smem:[#allocation3 + $0x3]]
        %s593 = scalar_lea.vmem %s327, 96 [#allocation5]
        %v594 = vld [vmem:[%s593] sm:$0xff]
        %v595 = vld [vmem:[%s593 + $0x8] sm:$0xff]
        %v596 = vld [vmem:[%s593 + $0x10] sm:$0xff]
        %v597 = vld [vmem:[%s593 + $0x18] sm:$0xff]
        %v598 = vunpack.c.0.s8 %v594
        %v599 = vunpack.c.1.s8 %v594
        %v600 = vunpack.c.2.s8 %v594
        %v601 = vunpack.c.3.s8 %v594
        %v602 = vunpack.c.0.s8 %v595
        %v603 = vunpack.c.1.s8 %v595
        %v604 = vunpack.c.2.s8 %v595
        %v605 = vunpack.c.3.s8 %v595
        %v606 = vunpack.c.0.s8 %v596
        %v607 = vunpack.c.1.s8 %v596
        %v608 = vunpack.c.2.s8 %v596
        %v609 = vunpack.c.3.s8 %v596
        %v610 = vunpack.c.0.s8 %v597
        %v611 = vunpack.c.1.s8 %v597
        %v612 = vunpack.c.2.s8 %v597
        %v613 = vunpack.c.3.s8 %v597
        %v614 = vcvt.s32.f32 %v598
        %v615 = vcvt.s32.f32 %v599
        %v616 = vcvt.s32.f32 %v600
        %v617 = vcvt.s32.f32 %v601
        %v618 = vcvt.s32.f32 %v602
        %v619 = vcvt.s32.f32 %v603
        %v620 = vcvt.s32.f32 %v604
        %v621 = vcvt.s32.f32 %v605
        %v622 = vcvt.s32.f32 %v606
        %v623 = vcvt.s32.f32 %v607
        %v624 = vcvt.s32.f32 %v608
        %v625 = vcvt.s32.f32 %v609
        %v626 = vcvt.s32.f32 %v610
        %v627 = vcvt.s32.f32 %v611
        %v628 = vcvt.s32.f32 %v612
        %v629 = vcvt.s32.f32 %v613
        %v630 = vstv %s592
        %v631 = vmul.f32 %v630, %v614
        %v632 = vmul.f32 %v630, %v615
        %v633 = vmul.f32 %v630, %v616
        %v634 = vmul.f32 %v630, %v617
        %v635 = vmul.f32 %v630, %v618
        %v636 = vmul.f32 %v630, %v619
        %v637 = vmul.f32 %v630, %v620
        %v638 = vmul.f32 %v630, %v621
        %v639 = vmul.f32 %v630, %v622
        %v640 = vmul.f32 %v630, %v623
        %v641 = vmul.f32 %v630, %v624
        %v642 = vmul.f32 %v630, %v625
        %v643 = vmul.f32 %v630, %v626
        %v644 = vmul.f32 %v630, %v627
        %v645 = vmul.f32 %v630, %v628
        %v646 = vmul.f32 %v630, %v629
        %v647 = vadd.f32 %v576, %v631
        %v648 = vadd.f32 %v577, %v632
        %v649 = vadd.f32 %v578, %v633
        %v650 = vadd.f32 %v579, %v634
        %v651 = vadd.f32 %v580, %v635
        %v652 = vadd.f32 %v581, %v636
        %v653 = vadd.f32 %v582, %v637
        %v654 = vadd.f32 %v583, %v638
        %v655 = vadd.f32 %v584, %v639
        %v656 = vadd.f32 %v585, %v640
        %v657 = vadd.f32 %v586, %v641
        %v658 = vadd.f32 %v587, %v642
        %v659 = vadd.f32 %v588, %v643
        %v660 = vadd.f32 %v589, %v644
        %v661 = vadd.f32 %v590, %v645
        %v662 = vadd.f32 %v591, %v646
        %v663 = vpack.c.bf16 %v647, %v647
        %v664 = vpack.c.bf16 %v648, %v648
        %v665 = vpack.c.bf16 %v649, %v649
        %v666 = vpack.c.bf16 %v650, %v650
        %v667 = vpack.c.bf16 %v651, %v651
        %v668 = vpack.c.bf16 %v652, %v652
        %v669 = vpack.c.bf16 %v653, %v653
        %v670 = vpack.c.bf16 %v654, %v654
        %v671 = vpack.c.bf16 %v655, %v655
        %v672 = vpack.c.bf16 %v656, %v656
        %v673 = vpack.c.bf16 %v657, %v657
        %v674 = vpack.c.bf16 %v658, %v658
        %v675 = vpack.c.bf16 %v659, %v659
        %v676 = vpack.c.bf16 %v660, %v660
        %v677 = vpack.c.bf16 %v661, %v661
        %v678 = vpack.c.bf16 %v662, %v662
        %679 = vst [vmem:[%s347] sm:$0xf] %v663
        %680 = vst [vmem:[%s347 + $0x4] sm:$0xf] %v664
        %681 = vst [vmem:[%s347 + $0x8] sm:$0xf] %v665
        %682 = vst [vmem:[%s347 + $0xc] sm:$0xf] %v666
        %683 = vst [vmem:[%s347 + $0x10] sm:$0xf] %v667
        %684 = vst [vmem:[%s347 + $0x14] sm:$0xf] %v668
        %685 = vst [vmem:[%s347 + $0x18] sm:$0xf] %v669
        %686 = vst [vmem:[%s347 + $0x1c] sm:$0xf] %v670
        %687 = vst [vmem:[%s347 + $0x20] sm:$0xf] %v671
        %688 = vst [vmem:[%s347 + $0x24] sm:$0xf] %v672
        %689 = vst [vmem:[%s347 + $0x28] sm:$0xf] %v673
        %690 = vst [vmem:[%s347 + $0x2c] sm:$0xf] %v674
        %691 = vst [vmem:[%s347 + $0x30] sm:$0xf] %v675
        %692 = vst [vmem:[%s347 + $0x34] sm:$0xf] %v676
        %693 = vst [vmem:[%s347 + $0x38] sm:$0xf] %v677
        %694 = vst [vmem:[%s347 + $0x3c] sm:$0xf] %v678
        %s695 = smul.u32 %s23, 128
        %v696 = vld [vmem:[#allocation2] sm:$0xff]
        %v697 = vld [vmem:[#allocation2 + $0x8] sm:$0xff]
        %v698 = vld [vmem:[#allocation2 + $0x10] sm:$0xff]
        %v699 = vld [vmem:[#allocation2 + $0x18] sm:$0xff]
        %v700 = vld [vmem:[#allocation2 + $0x20] sm:$0xff]
        %v701 = vld [vmem:[#allocation2 + $0x28] sm:$0xff]
        %v702 = vld [vmem:[#allocation2 + $0x30] sm:$0xff]
        %v703 = vld [vmem:[#allocation2 + $0x38] sm:$0xff]
        %v704 = vld [vmem:[#allocation2 + $0x40] sm:$0xff]
        %v705 = vld [vmem:[#allocation2 + $0x48] sm:$0xff]
        %v706 = vld [vmem:[#allocation2 + $0x50] sm:$0xff]
        %v707 = vld [vmem:[#allocation2 + $0x58] sm:$0xff]
        %v708 = vld [vmem:[#allocation2 + $0x60] sm:$0xff]
        %v709 = vld [vmem:[#allocation2 + $0x68] sm:$0xff]
        %v710 = vld [vmem:[#allocation2 + $0x70] sm:$0xff]
        %v711 = vld [vmem:[#allocation2 + $0x78] sm:$0xff]
        %s712 = sshra.s32 %s695, 3
        %s713 = sand.u32 %s695, 7
        %s714 = smul.addr %s712, 4
        %s715 = scalar_lea.vmem %s2, %s714
        %v716 = vld [vmem:[%s715] sm:$0xf]
        %v717 = vld [vmem:[%s715 + $0x4] sm:$0xf]
        %v718 = vld [vmem:[%s715 + $0x8] sm:$0xf]
        %v719 = vld [vmem:[%s715 + $0xc] sm:$0xf]
        %v720 = vld [vmem:[%s715 + $0x10] sm:$0xf]
        %v721 = vld [vmem:[%s715 + $0x14] sm:$0xf]
        %v722 = vld [vmem:[%s715 + $0x18] sm:$0xf]
        %v723 = vld [vmem:[%s715 + $0x1c] sm:$0xf]
        %v724 = vld [vmem:[%s715 + $0x20] sm:$0xf]
        %v725 = vld [vmem:[%s715 + $0x24] sm:$0xf]
        %v726 = vld [vmem:[%s715 + $0x28] sm:$0xf]
        %v727 = vld [vmem:[%s715 + $0x2c] sm:$0xf]
        %v728 = vld [vmem:[%s715 + $0x30] sm:$0xf]
        %v729 = vld [vmem:[%s715 + $0x34] sm:$0xf]
        %v730 = vld [vmem:[%s715 + $0x38] sm:$0xf]
        %v731 = vld [vmem:[%s715 + $0x3c] sm:$0xf]
        %v748 = vunpack.c.l.b16 %v663
        %v749 = vunpack.c.l.b16 %v664
        %v750 = vunpack.c.l.b16 %v665
        %v751 = vunpack.c.l.b16 %v666
        %v752 = vunpack.c.l.b16 %v667
        %v753 = vunpack.c.l.b16 %v668
        %v754 = vunpack.c.l.b16 %v669
        %v755 = vunpack.c.l.b16 %v670
        %v756 = vunpack.c.l.b16 %v671
        %v757 = vunpack.c.l.b16 %v672
        %v758 = vunpack.c.l.b16 %v673
        %v759 = vunpack.c.l.b16 %v674
        %v760 = vunpack.c.l.b16 %v675
        %v761 = vunpack.c.l.b16 %v676
        %v762 = vunpack.c.l.b16 %v677
        %v763 = vunpack.c.l.b16 %v678
        %v764 = vpack.c.b16 %v749, %v748
        %v765 = vpack.c.b16 %v751, %v750
        %v766 = vpack.c.b16 %v753, %v752
        %v767 = vpack.c.b16 %v755, %v754
        %v768 = vpack.c.b16 %v757, %v756
        %v769 = vpack.c.b16 %v759, %v758
        %v770 = vpack.c.b16 %v761, %v760
        %v771 = vpack.c.b16 %v763, %v762
        %v796 = vunpack.c.l.b16 %v716
        %v797 = vunpack.c.l.b16 %v717
        %v798 = vunpack.c.l.b16 %v718
        %v799 = vunpack.c.l.b16 %v719
        %v800 = vunpack.c.l.b16 %v720
        %v801 = vunpack.c.l.b16 %v721
        %v802 = vunpack.c.l.b16 %v722
        %v803 = vunpack.c.l.b16 %v723
        %v804 = vunpack.c.l.b16 %v724
        %v805 = vunpack.c.l.b16 %v725
        %v806 = vunpack.c.l.b16 %v726
        %v807 = vunpack.c.l.b16 %v727
        %v808 = vunpack.c.l.b16 %v728
        %v809 = vunpack.c.l.b16 %v729
        %v810 = vunpack.c.l.b16 %v730
        %v811 = vunpack.c.l.b16 %v731
        %v812 = vpack.c.b16 %v797, %v796
        %v813 = vpack.c.b16 %v799, %v798
        %v814 = vpack.c.b16 %v801, %v800
        %v815 = vpack.c.b16 %v803, %v802
        %v816 = vpack.c.b16 %v805, %v804
        %v817 = vpack.c.b16 %v807, %v806
        %v818 = vpack.c.b16 %v809, %v808
        %v819 = vpack.c.b16 %v811, %v810
        %828 = vmatpush.bf16.msra.mxu0 %v819
        %829 = vmatpush.bf16.msra.mxu0 %v818
        %830 = vmatpush.bf16.msra.mxu0 %v817
        %831 = vmatpush.bf16.msra.mxu0 %v816
        %832 = vmatpush.bf16.msra.mxu0 %v815
        %833 = vmatpush.bf16.msra.mxu0 %v814
        %834 = vmatpush.bf16.msra.mxu0 %v813
        %835 = vmatpush.bf16.msra.mxu0 %v812
        %836 = vmatmul.bf16.gmra.mxu0 %v764
        %v837 = vpop.f32.mrf.mxu0
        %v838 = vadd.f32 0.0, %v837
        %v839 = vpop.f32.mrf.mxu0
        %v840 = vadd.f32 0.0, %v839
        %841 = vmatmul.bf16.gmra.mxu0 %v765
        %v842 = vpop.f32.mrf.mxu0
        %v843 = vadd.f32 0.0, %v842
        %v844 = vpop.f32.mrf.mxu0
        %v845 = vadd.f32 0.0, %v844
        %846 = vmatmul.bf16.gmra.mxu0 %v766
        %v847 = vpop.f32.mrf.mxu0
        %v848 = vadd.f32 0.0, %v847
        %v849 = vpop.f32.mrf.mxu0
        %v850 = vadd.f32 0.0, %v849
        %851 = vmatmul.bf16.gmra.mxu0 %v767
        %v852 = vpop.f32.mrf.mxu0
        %v853 = vadd.f32 0.0, %v852
        %v854 = vpop.f32.mrf.mxu0
        %v855 = vadd.f32 0.0, %v854
        %856 = vmatmul.bf16.gmra.mxu0 %v768
        %v857 = vpop.f32.mrf.mxu0
        %v858 = vadd.f32 0.0, %v857
        %v859 = vpop.f32.mrf.mxu0
        %v860 = vadd.f32 0.0, %v859
        %861 = vmatmul.bf16.gmra.mxu0 %v769
        %v862 = vpop.f32.mrf.mxu0
        %v863 = vadd.f32 0.0, %v862
        %v864 = vpop.f32.mrf.mxu0
        %v865 = vadd.f32 0.0, %v864
        %866 = vmatmul.bf16.gmra.mxu0 %v770
        %v867 = vpop.f32.mrf.mxu0
        %v868 = vadd.f32 0.0, %v867
        %v869 = vpop.f32.mrf.mxu0
        %v870 = vadd.f32 0.0, %v869
        %871 = vmatmul.bf16.gmra.mxu0 %v771
        %v872 = vpop.f32.mrf.mxu0
        %v873 = vadd.f32 0.0, %v872
        %v874 = vpop.f32.mrf.mxu0
        %v875 = vadd.f32 0.0, %v874
        %876 = vdwg.mxu0
        %v877 = vadd.f32 %v696, %v838
        %v878 = vadd.f32 %v697, %v840
        %v879 = vadd.f32 %v698, %v843
        %v880 = vadd.f32 %v699, %v845
        %v881 = vadd.f32 %v700, %v848
        %v882 = vadd.f32 %v701, %v850
        %v883 = vadd.f32 %v702, %v853
        %v884 = vadd.f32 %v703, %v855
        %v885 = vadd.f32 %v704, %v858
        %v886 = vadd.f32 %v705, %v860
        %v887 = vadd.f32 %v706, %v863
        %v888 = vadd.f32 %v707, %v865
        %v889 = vadd.f32 %v708, %v868
        %v890 = vadd.f32 %v709, %v870
        %v891 = vadd.f32 %v710, %v873
        %v892 = vadd.f32 %v711, %v875
        %893 = vst [vmem:[#allocation2] sm:$0xff] %v877
        %894 = vst [vmem:[#allocation2 + $0x8] sm:$0xff] %v878
        %895 = vst [vmem:[#allocation2 + $0x10] sm:$0xff] %v879
        %896 = vst [vmem:[#allocation2 + $0x18] sm:$0xff] %v880
        %897 = vst [vmem:[#allocation2 + $0x20] sm:$0xff] %v881
        %898 = vst [vmem:[#allocation2 + $0x28] sm:$0xff] %v882
        %899 = vst [vmem:[#allocation2 + $0x30] sm:$0xff] %v883
        %900 = vst [vmem:[#allocation2 + $0x38] sm:$0xff] %v884
        %901 = vst [vmem:[#allocation2 + $0x40] sm:$0xff] %v885
        %902 = vst [vmem:[#allocation2 + $0x48] sm:$0xff] %v886
        %903 = vst [vmem:[#allocation2 + $0x50] sm:$0xff] %v887
        %904 = vst [vmem:[#allocation2 + $0x58] sm:$0xff] %v888
        %905 = vst [vmem:[#allocation2 + $0x60] sm:$0xff] %v889
        %906 = vst [vmem:[#allocation2 + $0x68] sm:$0xff] %v890
        %907 = vst [vmem:[#allocation2 + $0x70] sm:$0xff] %v891
        %908 = vst [vmem:[#allocation2 + $0x78] sm:$0xff] %v892
        %p909 = scmp.eq.s32.totalorder %s23, 2
        // Predicated region
        $region79: #{fame_forward.4} parent=65 // pred_check
          %p910 = pneg %p909
        $region80: #{fame_forward.4} parent=65 // pred_check_branch
          %912 = sbr.rel (%p910) target = $region82
        $region81: #{fame_forward.4} parent=65 // pred_region
          %v913 = vld [vmem:[#allocation2] sm:$0xff]
          %v914 = vld [vmem:[#allocation2 + $0x8] sm:$0xff]
          %v915 = vld [vmem:[#allocation2 + $0x10] sm:$0xff]
          %v916 = vld [vmem:[#allocation2 + $0x18] sm:$0xff]
          %v917 = vld [vmem:[#allocation2 + $0x20] sm:$0xff]
          %v918 = vld [vmem:[#allocation2 + $0x28] sm:$0xff]
          %v919 = vld [vmem:[#allocation2 + $0x30] sm:$0xff]
          %v920 = vld [vmem:[#allocation2 + $0x38] sm:$0xff]
          %v921 = vld [vmem:[#allocation2 + $0x40] sm:$0xff]
          %v922 = vld [vmem:[#allocation2 + $0x48] sm:$0xff]
          %v923 = vld [vmem:[#allocation2 + $0x50] sm:$0xff]
          %v924 = vld [vmem:[#allocation2 + $0x58] sm:$0xff]
          %v925 = vld [vmem:[#allocation2 + $0x60] sm:$0xff]
          %v926 = vld [vmem:[#allocation2 + $0x68] sm:$0xff]
          %v927 = vld [vmem:[#allocation2 + $0x70] sm:$0xff]
          %v928 = vld [vmem:[#allocation2 + $0x78] sm:$0xff]
          %929 = vst [vmem:[%s368] sm:$0xff] %v913
          %930 = vst [vmem:[%s368 + $0x8] sm:$0xff] %v914
          %931 = vst [vmem:[%s368 + $0x10] sm:$0xff] %v915
          %932 = vst [vmem:[%s368 + $0x18] sm:$0xff] %v916
          %933 = vst [vmem:[%s368 + $0x20] sm:$0xff] %v917
          %934 = vst [vmem:[%s368 + $0x28] sm:$0xff] %v918
          %935 = vst [vmem:[%s368 + $0x30] sm:$0xff] %v919
          %936 = vst [vmem:[%s368 + $0x38] sm:$0xff] %v920
          %937 = vst [vmem:[%s368 + $0x40] sm:$0xff] %v921
          %938 = vst [vmem:[%s368 + $0x48] sm:$0xff] %v922
          %939 = vst [vmem:[%s368 + $0x50] sm:$0xff] %v923
          %940 = vst [vmem:[%s368 + $0x58] sm:$0xff] %v924
          %941 = vst [vmem:[%s368 + $0x60] sm:$0xff] %v925
          %942 = vst [vmem:[%s368 + $0x68] sm:$0xff] %v926
          %943 = vst [vmem:[%s368 + $0x70] sm:$0xff] %v927
          %944 = vst [vmem:[%s368 + $0x78] sm:$0xff] %v928
          %v945 = vld [vmem:[#allocation2] sm:$0xff]
          %v946 = vld [vmem:[#allocation2 + $0x8] sm:$0xff]
          %v947 = vld [vmem:[#allocation2 + $0x10] sm:$0xff]
          %v948 = vld [vmem:[#allocation2 + $0x18] sm:$0xff]
          %v949 = vld [vmem:[#allocation2 + $0x20] sm:$0xff]
          %v950 = vld [vmem:[#allocation2 + $0x28] sm:$0xff]
          %v951 = vld [vmem:[#allocation2 + $0x30] sm:$0xff]
          %v952 = vld [vmem:[#allocation2 + $0x38] sm:$0xff]
          %v953 = vld [vmem:[#allocation2 + $0x40] sm:$0xff]
          %v954 = vld [vmem:[#allocation2 + $0x48] sm:$0xff]
          %v955 = vld [vmem:[#allocation2 + $0x50] sm:$0xff]
          %v956 = vld [vmem:[#allocation2 + $0x58] sm:$0xff]
          %v957 = vld [vmem:[#allocation2 + $0x60] sm:$0xff]
          %v958 = vld [vmem:[#allocation2 + $0x68] sm:$0xff]
          %v959 = vld [vmem:[#allocation2 + $0x70] sm:$0xff]
          %v960 = vld [vmem:[#allocation2 + $0x78] sm:$0xff]
          %v961 = vpack.c.bf16 %v945, %v945
          %v962 = vpack.c.bf16 %v946, %v946
          %v963 = vpack.c.bf16 %v947, %v947
          %v964 = vpack.c.bf16 %v948, %v948
          %v965 = vpack.c.bf16 %v949, %v949
          %v966 = vpack.c.bf16 %v950, %v950
          %v967 = vpack.c.bf16 %v951, %v951
          %v968 = vpack.c.bf16 %v952, %v952
          %v969 = vpack.c.bf16 %v953, %v953
          %v970 = vpack.c.bf16 %v954, %v954
          %v971 = vpack.c.bf16 %v955, %v955
          %v972 = vpack.c.bf16 %v956, %v956
          %v973 = vpack.c.bf16 %v957, %v957
          %v974 = vpack.c.bf16 %v958, %v958
          %v975 = vpack.c.bf16 %v959, %v959
          %v976 = vpack.c.bf16 %v960, %v960
          %977 = vst [vmem:[%s374] sm:$0xf] %v961
          %978 = vst [vmem:[%s374 + $0x4] sm:$0xf] %v962
          %979 = vst [vmem:[%s374 + $0x8] sm:$0xf] %v963
          %980 = vst [vmem:[%s374 + $0xc] sm:$0xf] %v964
          %981 = vst [vmem:[%s374 + $0x10] sm:$0xf] %v965
          %982 = vst [vmem:[%s374 + $0x14] sm:$0xf] %v966
          %983 = vst [vmem:[%s374 + $0x18] sm:$0xf] %v967
          %984 = vst [vmem:[%s374 + $0x1c] sm:$0xf] %v968
          %985 = vst [vmem:[%s374 + $0x20] sm:$0xf] %v969
          %986 = vst [vmem:[%s374 + $0x24] sm:$0xf] %v970
          %987 = vst [vmem:[%s374 + $0x28] sm:$0xf] %v971
          %988 = vst [vmem:[%s374 + $0x2c] sm:$0xf] %v972
          %989 = vst [vmem:[%s374 + $0x30] sm:$0xf] %v973
          %990 = vst [vmem:[%s374 + $0x34] sm:$0xf] %v974
          %991 = vst [vmem:[%s374 + $0x38] sm:$0xf] %v975
          %992 = vst [vmem:[%s374 + $0x3c] sm:$0xf] %v976
        $region82: #{fame_forward.4} parent=65 // pred_fallthru
          _
        %s993 = sand.u32 %s110, 1
        %s994 = sand.u32 %s110, 1
        %s995 = smul.addr %s994, 64
        %s996 = scalar_lea.vmem [#allocation6], %s995
        %s997 = smul.u32 16, %s22
        %p998 = scmp.lt.s32.totalorder %s997, 47
        %s999 = scalar_select %p998, %s997, 47
        %s1000 = smul.addr %s999, 8
        %s1001 = scalar_lea.vmem %s4, %s1000
        %s1002 = smul.u32 16, %s22
        %p1003 = scmp.lt.s32.totalorder %s1002, 47
        %s1004 = scalar_select %p1003, %s1002, 47
        %s1005 = smul.addr %s1004, 4
        %s1006 = scalar_lea.vmem %s5, %s1005
        // Predicated region
        $region83: #{fame_forward.4} parent=65 // pred_check
          %p1007 = pneg %p120
        $region84: #{fame_forward.4} parent=65 // pred_check_branch
          %1009 = sbr.rel (%p1007) target = $region86
        $region85: #{fame_forward.4} parent=65 // pred_region
          %s1010 = smul.u32 16, %s22
          %s1011 = smul.addr %s1010, 3
          %s1012 = sadd.s32 %s23, %s1011
          %s1013 = smul.addr %s1012, 4
          %s1014 = scalar_lea.vmem %s3, %s1013
          // Predicated region
          $region87: #{fame_forward.4} parent=85 // pred_check
            _
          $region88: #{fame_forward.4} parent=85 // pred_check_branch
            %1016 = sbr.rel (0) target = $region90
          $region89: #{fame_forward.4} parent=85 // pred_region
            // Predicated region
            $region91: #{fame_forward.4} parent=89 // pred_check
              _
            $region92: #{fame_forward.4} parent=89 // pred_check_branch
              %1018 = sbr.rel target = $region94
            $region93: #{fame_forward.4} parent=89 // pred_region
              // Predicated region
              $region106: #{fame_forward.4} parent=93 // pred_check
                _
              $region107: #{fame_forward.4} parent=93 // pred_check_branch
                %1064 = sbr.rel (0) target = $region109
              $region108: #{fame_forward.4} parent=93 // pred_region
                loop: start=0, step=1, limit=1
                $region110: #{fame_forward.4} parent=108 // loop_pre_header
                  _
                $region111: #{fame_forward.4} parent=108 // loop_header
                  %s1066 = sphi 0, %s1070
                  %p1067 = scmp.ge.s32.totalorder %s1066, 1
                  %s1071 = sphi %s996, %s996
                  %s1072 = sphi %s1014, %s1014
                $region112: #{fame_forward.4} parent=108 // loop_header_branch
                  %1069 = sbr.rel (%p1067) target = $region116
                $region113: #{fame_forward.4} parent=108 // loop_body
                  _
                $region114: #{fame_forward.4} parent=108 // loop_footer
                  %s1070 = sadd.s32 1, %s1066
                $region115: #{fame_forward.4} parent=108 // loop_footer_branch
                  %1065 = sbr.rel target = $region111
                $region116: #{fame_forward.4} parent=108 // loop_exit
                  _
                %s1074 = ssub.s32 16, 1
                loop: start=0, step=1, limit=1
                $region117: #{fame_forward.4} parent=108 // loop_pre_header
                  _
                $region118: #{fame_forward.4} parent=108 // loop_header
                  %s1076 = sphi 0, %s1080
                  %p1077 = scmp.ge.s32.totalorder %s1076, 1
                  %s1081 = sphi %s996, %s996
                  %s1082 = sphi %s1014, %s1014
                $region119: #{fame_forward.4} parent=108 // loop_header_branch
                  %1079 = sbr.rel (%p1077) target = $region123
                $region120: #{fame_forward.4} parent=108 // loop_body
                  %v1083 = vld [vmem:[%s1081] sm:%s1074]
                  %1084 = vst [vmem:[%s1082] sm:%s1074] %v1083
                  %v1085 = vld [vmem:[%s1081 + $0x4] sm:%s1074]
                  %1086 = vst [vmem:[%s1082 + $0xc] sm:%s1074] %v1085
                  %v1087 = vld [vmem:[%s1081 + $0x8] sm:%s1074]
                  %1088 = vst [vmem:[%s1082 + $0x18] sm:%s1074] %v1087
                  %v1089 = vld [vmem:[%s1081 + $0xc] sm:%s1074]
                  %1090 = vst [vmem:[%s1082 + $0x24] sm:%s1074] %v1089
                  %v1091 = vld [vmem:[%s1081 + $0x10] sm:%s1074]
                  %1092 = vst [vmem:[%s1082 + $0x30] sm:%s1074] %v1091
                  %v1093 = vld [vmem:[%s1081 + $0x14] sm:%s1074]
                  %1094 = vst [vmem:[%s1082 + $0x3c] sm:%s1074] %v1093
                  %v1095 = vld [vmem:[%s1081 + $0x18] sm:%s1074]
                  %1096 = vst [vmem:[%s1082 + $0x48] sm:%s1074] %v1095
                  %v1097 = vld [vmem:[%s1081 + $0x1c] sm:%s1074]
                  %1098 = vst [vmem:[%s1082 + $0x54] sm:%s1074] %v1097
                  %v1099 = vld [vmem:[%s1081 + $0x20] sm:%s1074]
                  %1100 = vst [vmem:[%s1082 + $0x60] sm:%s1074] %v1099
                  %v1101 = vld [vmem:[%s1081 + $0x24] sm:%s1074]
                  %1102 = vst [vmem:[%s1082 + $0x6c] sm:%s1074] %v1101
                  %v1103 = vld [vmem:[%s1081 + $0x28] sm:%s1074]
                  %1104 = vst [vmem:[%s1082 + $0x78] sm:%s1074] %v1103
                  %v1105 = vld [vmem:[%s1081 + $0x2c] sm:%s1074]
                  %1106 = vst [vmem:[%s1082 + $0x84] sm:%s1074] %v1105
                  %v1107 = vld [vmem:[%s1081 + $0x30] sm:%s1074]
                  %1108 = vst [vmem:[%s1082 + $0x90] sm:%s1074] %v1107
                  %v1109 = vld [vmem:[%s1081 + $0x34] sm:%s1074]
                  %1110 = vst [vmem:[%s1082 + $0x9c] sm:%s1074] %v1109
                  %v1111 = vld [vmem:[%s1081 + $0x38] sm:%s1074]
                  %1112 = vst [vmem:[%s1082 + $0xa8] sm:%s1074] %v1111
                  %v1113 = vld [vmem:[%s1081 + $0x3c] sm:%s1074]
                  %1114 = vst [vmem:[%s1082 + $0xb4] sm:%s1074] %v1113
                $region121: #{fame_forward.4} parent=108 // loop_footer
                  %s1080 = sadd.s32 1, %s1076
                $region122: #{fame_forward.4} parent=108 // loop_footer_branch
                  %1075 = sbr.rel target = $region118
                $region123: #{fame_forward.4} parent=108 // loop_exit
                  _
              $region109: #{fame_forward.4} parent=93 // pred_fallthru
                _
            $region94: #{fame_forward.4} parent=89 // pred_fallthru
              _
            // Predicated region
            $region95: #{fame_forward.4} parent=89 // pred_check
              _
            $region96: #{fame_forward.4} parent=89 // pred_check_branch
              %1020 = sbr.rel (0) target = $region98
            $region97: #{fame_forward.4} parent=89 // pred_region
              %s1022 = ssub.s32 16, 1
              loop: start=0, step=1, limit=1
              $region99: #{fame_forward.4} parent=97 // loop_pre_header
                _
              $region100: #{fame_forward.4} parent=97 // loop_header
                %s1024 = sphi 0, %s1028
                %p1025 = scmp.ge.s32.totalorder %s1024, 1
                %s1029 = sphi %s996, %s996
                %s1030 = sphi %s1014, %s1014
              $region101: #{fame_forward.4} parent=97 // loop_header_branch
                %1027 = sbr.rel (%p1025) target = $region105
              $region102: #{fame_forward.4} parent=97 // loop_body
                %v1031 = vld [vmem:[%s1029] sm:%s1022]
                %1032 = vst [vmem:[%s1030] sm:%s1022] %v1031
                %v1033 = vld [vmem:[%s1029 + $0x4] sm:%s1022]
                %1034 = vst [vmem:[%s1030 + $0xc] sm:%s1022] %v1033
                %v1035 = vld [vmem:[%s1029 + $0x8] sm:%s1022]
                %1036 = vst [vmem:[%s1030 + $0x18] sm:%s1022] %v1035
                %v1037 = vld [vmem:[%s1029 + $0xc] sm:%s1022]
                %1038 = vst [vmem:[%s1030 + $0x24] sm:%s1022] %v1037
                %v1039 = vld [vmem:[%s1029 + $0x10] sm:%s1022]
                %1040 = vst [vmem:[%s1030 + $0x30] sm:%s1022] %v1039
                %v1041 = vld [vmem:[%s1029 + $0x14] sm:%s1022]
                %1042 = vst [vmem:[%s1030 + $0x3c] sm:%s1022] %v1041
                %v1043 = vld [vmem:[%s1029 + $0x18] sm:%s1022]
                %1044 = vst [vmem:[%s1030 + $0x48] sm:%s1022] %v1043
                %v1045 = vld [vmem:[%s1029 + $0x1c] sm:%s1022]
                %1046 = vst [vmem:[%s1030 + $0x54] sm:%s1022] %v1045
                %v1047 = vld [vmem:[%s1029 + $0x20] sm:%s1022]
                %1048 = vst [vmem:[%s1030 + $0x60] sm:%s1022] %v1047
                %v1049 = vld [vmem:[%s1029 + $0x24] sm:%s1022]
                %1050 = vst [vmem:[%s1030 + $0x6c] sm:%s1022] %v1049
                %v1051 = vld [vmem:[%s1029 + $0x28] sm:%s1022]
                %1052 = vst [vmem:[%s1030 + $0x78] sm:%s1022] %v1051
                %v1053 = vld [vmem:[%s1029 + $0x2c] sm:%s1022]
                %1054 = vst [vmem:[%s1030 + $0x84] sm:%s1022] %v1053
                %v1055 = vld [vmem:[%s1029 + $0x30] sm:%s1022]
                %1056 = vst [vmem:[%s1030 + $0x90] sm:%s1022] %v1055
                %v1057 = vld [vmem:[%s1029 + $0x34] sm:%s1022]
                %1058 = vst [vmem:[%s1030 + $0x9c] sm:%s1022] %v1057
                %v1059 = vld [vmem:[%s1029 + $0x38] sm:%s1022]
                %1060 = vst [vmem:[%s1030 + $0xa8] sm:%s1022] %v1059
                %v1061 = vld [vmem:[%s1029 + $0x3c] sm:%s1022]
                %1062 = vst [vmem:[%s1030 + $0xb4] sm:%s1022] %v1061
              $region103: #{fame_forward.4} parent=97 // loop_footer
                %s1028 = sadd.s32 1, %s1024
              $region104: #{fame_forward.4} parent=97 // loop_footer_branch
                %1023 = sbr.rel target = $region100
              $region105: #{fame_forward.4} parent=97 // loop_exit
                _
            $region98: #{fame_forward.4} parent=89 // pred_fallthru
              _
          $region90: #{fame_forward.4} parent=85 // pred_fallthru
            _
          %1115 = vnop
        $region86: #{fame_forward.4} parent=65 // pred_fallthru
          _
        // Predicated region
        $region124: #{fame_forward.4} parent=65 // pred_check
          %p1116 = pneg %p146
        $region125: #{fame_forward.4} parent=65 // pred_check_branch
          %1118 = sbr.rel (%p1116) target = $region127
        $region126: #{fame_forward.4} parent=65 // pred_region
          %s1119 = smul.u32 16, %s22
        $region127: #{fame_forward.4} parent=65 // pred_fallthru
          _
        // Predicated region
        $region128: #{fame_forward.4} parent=65 // pred_check
          %p1120 = pneg %p172
        $region129: #{fame_forward.4} parent=65 // pred_check_branch
          %1122 = sbr.rel (%p1120) target = $region131
        $region130: #{fame_forward.4} parent=65 // pred_region
          %s1123 = smul.u32 16, %s22
        $region131: #{fame_forward.4} parent=65 // pred_fallthru
          _
      $region66: #{fame_forward.4} parent=5 // pred_fallthru
        _
      %p1124 = scmp.le.s32.totalorder 2, %s13
      // Predicated region
      $region132: #{fame_forward.4} parent=5 // pred_check
        %p1125 = pneg %p1124
      $region133: #{fame_forward.4} parent=5 // pred_check_branch
        %1127 = sbr.rel (%p1125) target = $region135
      $region134: #{fame_forward.4} parent=5 // pred_region
        %s1128 = ssub.s32 %s13, 2
        // Predicated region
        $region136: #{fame_forward.4} parent=134 // pred_check
          %p1129 = pneg %p126
        $region137: #{fame_forward.4} parent=134 // pred_check_branch
          %1131 = sbr.rel (%p1129) target = $region139
        $region138: #{fame_forward.4} parent=134 // pred_region
          %s1132 = sand.u32 %s111, 1
          %s1133 = sand.u32 %s111, 1
          %s1134 = smul.addr %s1133, 64
          %s1135 = scalar_lea.vmem [#allocation6], %s1134
        $region139: #{fame_forward.4} parent=134 // pred_fallthru
          _
        // Predicated region
        $region140: #{fame_forward.4} parent=134 // pred_check
          %p1136 = pneg %p152
        $region141: #{fame_forward.4} parent=134 // pred_check_branch
          %1138 = sbr.rel (%p1136) target = $region143
        $region142: #{fame_forward.4} parent=134 // pred_region
          %s1139 = smul.u32 16, %s24
          %p1140 = scmp.lt.s32.totalorder %s1139, 47
          %s1141 = scalar_select %p1140, %s1139, 47
          %s1142 = smul.addr %s1141, 8
          %s1143 = scalar_lea.vmem %s4, %s1142
        $region143: #{fame_forward.4} parent=134 // pred_fallthru
          _
        // Predicated region
        $region144: #{fame_forward.4} parent=134 // pred_check
          %p1144 = pneg %p178
        $region145: #{fame_forward.4} parent=134 // pred_check_branch
          %1146 = sbr.rel (%p1144) target = $region147
        $region146: #{fame_forward.4} parent=134 // pred_region
          %s1147 = smul.u32 16, %s24
          %p1148 = scmp.lt.s32.totalorder %s1147, 47
          %s1149 = scalar_select %p1148, %s1147, 47
          %s1150 = smul.addr %s1149, 4
          %s1151 = scalar_lea.vmem %s5, %s1150
        $region147: #{fame_forward.4} parent=134 // pred_fallthru
          _
      $region135: #{fame_forward.4} parent=5 // pred_fallthru
        _
    $region6: #{fame_forward.4} parent=1 // loop_footer
      %s17 = sadd.s32 1, %s13
    $region7: #{fame_forward.4} parent=1 // loop_footer_branch
      %12 = sbr.rel target = $region3
    $region8: #{fame_forward.4} parent=1 // loop_exit
      _
    %1152 = vsyncpa [#allocation4], 1
    %s1153 = scalar_lea.sflag [#allocation4], 1
    %1154 = vsyncpa %s1153, 1

// kernel: fame_forward.5
$region0: #{fame_forward.5}
  #allocation0 [shape = 'u32[]', space=smem, size = 0x4, offset = 0x4, fixed_abs, tag = 'smem constant byte address 0x4 - core index']
  #allocation1 [shape = 'u32[72,128]{1,0:T(1,128)}', space=vmem, size = 0x9000, scoped, tag = 'internal scratch']
  #allocation2 [shape = 'f32[128,128]{1,0:T(8,128)}', space=vmem, size = 0x10000, scoped, tag = 'scratch operand']
  %s0 = inlined_call_operand.vmem [shape: f32[3], index: 0, kind: input, shape index: {}]
  %s1 = inlined_call_operand.vmem [shape: bf16[384,384], index: 1, kind: input, shape index: {}]
  %s2 = inlined_call_operand.vmem [shape: bf16[384,128], index: 2, kind: input, shape index: {}]
  %s3 = inlined_call_operand.vmem [shape: f32[384,128], index: 3, kind: input, shape index: {}]
  %s4 = inlined_call_operand.vmem [shape: f32[384,128], index: 4, kind: input, shape index: {}]
  %s5 = inlined_call_operand.vmem [shape: f32[384,128], index: 5, kind: output, shape index: {}]
  %s6 = sld [smem:[#allocation0]]
  $region106: #{fame_forward.5} parent=0
    _
  %s8 = ssub.s32 1, %s6
  %s9 = scalar_select 0, %s8, %s6
  $region1: #{fame_forward.5} parent=0
    #allocation3 [shape = 'u8[512]{0}', space=smem, size = 0x200, scoped, tag = 'input window, operand 0, single buffered']
    #allocation4 [shape = 's32[2]{0}', space=sflag, size = 0x8, scoped, tag = 'scoped memory for fame_forward.5']
    #allocation5 [shape = 'u8[65536]{0}', space=vmem, size = 0x10000, scoped, tag = 'input window, operand 1']
    %10 = vsyncpa [#allocation4], 0
    loop: start=0, step=1, limit=11
    $region2: #{fame_forward.5} parent=1 // loop_pre_header
      _
    $region3: #{fame_forward.5} parent=1 // loop_header
      %s12 = sphi 0, %s16
      %p13 = scmp.ge.s32.totalorder %s12, 11
      %s19 = sphi 0, %s31
      %s20 = sphi 0, %s27
      %s21 = sphi 0, %s19
      %s22 = sphi 0, %s20
      %s23 = sphi 0, %s21
      %s24 = sphi 0, %s22
      %s32 = sphi 0, %s32
      %s34 = sphi 0, %s32
      %s35 = sphi 0, %s34
      %s49 = sphi 0, %s35
      %s57 = sphi 0, %s59
      %s60 = sphi 0, %s57
      %s61 = sphi 0, %s60
      %s77 = sphi 0, %s61
      %s81 = sphi 0, %s81
      %s83 = sphi 0, %s81
      %s84 = sphi 0, %s83
      %s98 = sphi 0, %s84
      %s104 = sphi 0, %s106
      %s107 = sphi 0, %s104
      %s108 = sphi 0, %s107
      %s124 = sphi 0, %s108
      %s130 = sphi 0, %s132
      %s133 = sphi 0, %s130
      %s134 = sphi 0, %s133
      %s150 = sphi 0, %s134
      %s156 = sphi 0, %s158
      %s159 = sphi 0, %s156
      %s160 = sphi 0, %s159
      %s176 = sphi 0, %s160
    $region4: #{fame_forward.5} parent=1 // loop_header_branch
      %15 = sbr.rel (%p13) target = $region8
    $region5: #{fame_forward.5} parent=1 // loop_body
      %s17 = ssub.s32 %s12, 1
      %s18 = ssub.s32 %s12, 2
      %s25 = sadd.s32 1, %s20
      %p26 = scmp.ge.s32.totalorder %s25, 3
      %s27 = scalar_select %p26, 0, %s25
      %s28 = sadd.s32 1, %s19
      %s29 = scalar_select %p26, %s28, %s19
      %p30 = scmp.ge.s32.totalorder %s29, 3
      %s31 = scalar_select %p30, 0, %s29
      %s33 = sadd.s32 %s32, 1
      %p36 = scmp.eq.s32.totalorder %s12, 8
      %p37 = scmp.ne.s32.totalorder %s32, %s34
      %p38 = scmp.eq.s32.totalorder %s12, 0
      %p39 = por %p37, %p38
      %p40 = scmp.ne.s32.totalorder %s32, %s34
      %p41 = scmp.eq.s32.totalorder %s17, 8
      %p42 = por %p40, %p41
      %p43 = scmp.ne.s32.totalorder %s34, %s35
      %p44 = scmp.eq.s32.totalorder %s17, 0
      %p45 = por %p43, %p44
      %p46 = scmp.ne.s32.totalorder %s34, %s35
      %p47 = scmp.eq.s32.totalorder %s18, 8
      %p48 = por %p46, %p47
      %p50 = scmp.ne.s32.totalorder %s35, %s49
      %p51 = scmp.eq.s32.totalorder %s18, 0
      %p52 = por %p50, %p51
      %s53 = ssub.s32 %s19, %s31
      %s54 = ssub.s32 %s20, %s27
      %s55 = sor.u32 %s53, %s54
      %p56 = scmp.eq.s32.totalorder %s55, 0
      %s58 = sadd.s32 %s57, 1
      %s59 = scalar_select %p56, %s57, %s58
      %p62 = pneg %p56
      %p63 = scmp.eq.s32.totalorder %s12, 8
      %p64 = por %p62, %p63
      %p65 = scmp.ne.s32.totalorder %s57, %s60
      %p66 = scmp.eq.s32.totalorder %s12, 0
      %p67 = por %p65, %p66
      %p68 = scmp.ne.s32.totalorder %s57, %s60
      %p69 = scmp.eq.s32.totalorder %s17, 8
      %p70 = por %p68, %p69
      %p71 = scmp.ne.s32.totalorder %s60, %s61
      %p72 = scmp.eq.s32.totalorder %s17, 0
      %p73 = por %p71, %p72
      %p74 = scmp.ne.s32.totalorder %s60, %s61
      %p75 = scmp.eq.s32.totalorder %s18, 8
      %p76 = por %p74, %p75
      %p78 = scmp.ne.s32.totalorder %s61, %s77
      %p79 = scmp.eq.s32.totalorder %s18, 0
      %p80 = por %p78, %p79
      %s82 = sadd.s32 %s81, 1
      %p85 = scmp.eq.s32.totalorder %s12, 8
      %p86 = scmp.ne.s32.totalorder %s81, %s83
      %p87 = scmp.eq.s32.totalorder %s12, 0
      %p88 = por %p86, %p87
      %p89 = scmp.ne.s32.totalorder %s81, %s83
      %p90 = scmp.eq.s32.totalorder %s17, 8
      %p91 = por %p89, %p90
      %p92 = scmp.ne.s32.totalorder %s83, %s84
      %p93 = scmp.eq.s32.totalorder %s17, 0
      %p94 = por %p92, %p93
      %p95 = scmp.ne.s32.totalorder %s83, %s84
      %p96 = scmp.eq.s32.totalorder %s18, 8
      %p97 = por %p95, %p96
      %p99 = scmp.ne.s32.totalorder %s84, %s98
      %p100 = scmp.eq.s32.totalorder %s18, 0
      %p101 = por %p99, %p100
      %s102 = ssub.s32 %s19, %s31
      %p103 = scmp.eq.s32.totalorder %s102, 0
      %s105 = sadd.s32 %s104, 1
      %s106 = scalar_select %p103, %s104, %s105
      %p109 = pneg %p103
      %p110 = scmp.eq.s32.totalorder %s12, 8
      %p111 = por %p109, %p110
      %p112 = scmp.ne.s32.totalorder %s104, %s107
      %p113 = scmp.eq.s32.totalorder %s12, 0
      %p114 = por %p112, %p113
      %p115 = scmp.ne.s32.totalorder %s104, %s107
      %p116 = scmp.eq.s32.totalorder %s17, 8
      %p117 = por %p115, %p116
      %p118 = scmp.ne.s32.totalorder %s107, %s108
      %p119 = scmp.eq.s32.totalorder %s17, 0
      %p120 = por %p118, %p119
      %p121 = scmp.ne.s32.totalorder %s107, %s108
      %p122 = scmp.eq.s32.totalorder %s18, 8
      %p123 = por %p121, %p122
      %p125 = scmp.ne.s32.totalorder %s108, %s124
      %p126 = scmp.eq.s32.totalorder %s18, 0
      %p127 = por %p125, %p126
      %s128 = ssub.s32 %s19, %s31
      %p129 = scmp.eq.s32.totalorder %s128, 0
      %s131 = sadd.s32 %s130, 1
      %s132 = scalar_select %p129, %s130, %s131
      %p135 = pneg %p129
      %p136 = scmp.eq.s32.totalorder %s12, 8
      %p137 = por %p135, %p136
      %p138 = scmp.ne.s32.totalorder %s130, %s133
      %p139 = scmp.eq.s32.totalorder %s12, 0
      %p140 = por %p138, %p139
      %p141 = scmp.ne.s32.totalorder %s130, %s133
      %p142 = scmp.eq.s32.totalorder %s17, 8
      %p143 = por %p141, %p142
      %p144 = scmp.ne.s32.totalorder %s133, %s134
      %p145 = scmp.eq.s32.totalorder %s17, 0
      %p146 = por %p144, %p145
      %p147 = scmp.ne.s32.totalorder %s133, %s134
      %p148 = scmp.eq.s32.totalorder %s18, 8
      %p149 = por %p147, %p148
      %p151 = scmp.ne.s32.totalorder %s134, %s150
      %p152 = scmp.eq.s32.totalorder %s18, 0
      %p153 = por %p151, %p152
      %s154 = ssub.s32 %s19, %s31
      %p155 = scmp.eq.s32.totalorder %s154, 0
      %s157 = sadd.s32 %s156, 1
      %s158 = scalar_select %p155, %s156, %s157
      %p161 = pneg %p155
      %p162 = scmp.eq.s32.totalorder %s12, 8
      %p163 = por %p161, %p162
      %p164 = scmp.ne.s32.totalorder %s156, %s159
      %p165 = scmp.eq.s32.totalorder %s12, 0
      %p166 = por %p164, %p165
      %p167 = scmp.ne.s32.totalorder %s156, %s159
      %p168 = scmp.eq.s32.totalorder %s17, 8
      %p169 = por %p167, %p168
      %p170 = scmp.ne.s32.totalorder %s159, %s160
      %p171 = scmp.eq.s32.totalorder %s17, 0
      %p172 = por %p170, %p171
      %p173 = scmp.ne.s32.totalorder %s159, %s160
      %p174 = scmp.eq.s32.totalorder %s18, 8
      %p175 = por %p173, %p174
      %p177 = scmp.ne.s32.totalorder %s160, %s176
      %p178 = scmp.eq.s32.totalorder %s18, 0
      %p179 = por %p177, %p178
      %p180 = scmp.le.s32.totalorder 1, %s12
      %p181 = scmp.lt.s32.totalorder %s12, 10
      %p182 = pnand %p180, %p181
      %p183 = pneg %p182
      // Predicated region
      $region9: #{fame_forward.5} parent=5 // pred_check
        _
      $region10: #{fame_forward.5} parent=5 // pred_check_branch
        %185 = sbr.rel (%p182) target = $region12
      $region11: #{fame_forward.5} parent=5 // pred_region
        %s186 = ssub.s32 %s12, 1
        // Predicated region
        $region13: #{fame_forward.5} parent=11 // pred_check
          %p187 = pneg %p45
        $region14: #{fame_forward.5} parent=11 // pred_check_branch
          %189 = sbr.rel (%p187) target = $region16
        $region15: #{fame_forward.5} parent=11 // pred_region
          %191 = vsyncadd [#allocation4], 0
          %s193 = sshll.u32 %s0, 4
          %s194 = int_to_ptr.vmem [resolvable:$true] %s193
          %196 = dma.vmem_to_smem %s194, 16, [#allocation3], [#allocation4]
        $region16: #{fame_forward.5} parent=11 // pred_fallthru
          _
        // Predicated region
        $region17: #{fame_forward.5} parent=11 // pred_check
          %p197 = pneg %p94
        $region18: #{fame_forward.5} parent=11 // pred_check_branch
          %199 = sbr.rel (%p197) target = $region20
        $region19: #{fame_forward.5} parent=11 // pred_region
          _
        $region20: #{fame_forward.5} parent=11 // pred_fallthru
          _
      $region12: #{fame_forward.5} parent=5 // pred_fallthru
        _
      %p200 = scmp.lt.s32.totalorder %s12, 9
      // Predicated region
      $region21: #{fame_forward.5} parent=5 // pred_check
        %p201 = pneg %p200
      $region22: #{fame_forward.5} parent=5 // pred_check_branch
        %203 = sbr.rel (%p201) target = $region24
      $region23: #{fame_forward.5} parent=5 // pred_region
        // Predicated region
        $region25: #{fame_forward.5} parent=23 // pred_check
          %p204 = pneg %p67
        $region26: #{fame_forward.5} parent=23 // pred_check_branch
          %206 = sbr.rel (%p204) target = $region28
        $region27: #{fame_forward.5} parent=23 // pred_region
          %s207 = sand.u32 %s57, 1
          %s208 = sand.u32 %s57, 1
          %s209 = smul.addr %s208, 64
          %s210 = scalar_lea.vmem [#allocation5], %s209
          %s211 = smul.u32 16, %s19
          %s212 = smul.addr %s211, 3
          %s213 = sadd.s32 %s20, %s212
          %s214 = smul.addr %s213, 4
          %s215 = scalar_lea.vmem %s1, %s214
          // Predicated region
          $region29: #{fame_forward.5} parent=27 // pred_check
            _
          $region30: #{fame_forward.5} parent=27 // pred_check_branch
            %217 = sbr.rel (0) target = $region32
          $region31: #{fame_forward.5} parent=27 // pred_region
            // Predicated region
            $region33: #{fame_forward.5} parent=31 // pred_check
              _
            $region34: #{fame_forward.5} parent=31 // pred_check_branch
              %219 = sbr.rel target = $region36
            $region35: #{fame_forward.5} parent=31 // pred_region
              // Predicated region
              $region48: #{fame_forward.5} parent=35 // pred_check
                _
              $region49: #{fame_forward.5} parent=35 // pred_check_branch
                %265 = sbr.rel (0) target = $region51
              $region50: #{fame_forward.5} parent=35 // pred_region
                loop: start=0, step=1, limit=1
                $region52: #{fame_forward.5} parent=50 // loop_pre_header
                  _
                $region53: #{fame_forward.5} parent=50 // loop_header
                  %s267 = sphi 0, %s271
                  %p268 = scmp.ge.s32.totalorder %s267, 1
                  %s272 = sphi %s215, %s215
                  %s273 = sphi %s210, %s210
                $region54: #{fame_forward.5} parent=50 // loop_header_branch
                  %270 = sbr.rel (%p268) target = $region58
                $region55: #{fame_forward.5} parent=50 // loop_body
                  _
                $region56: #{fame_forward.5} parent=50 // loop_footer
                  %s271 = sadd.s32 1, %s267
                $region57: #{fame_forward.5} parent=50 // loop_footer_branch
                  %266 = sbr.rel target = $region53
                $region58: #{fame_forward.5} parent=50 // loop_exit
                  _
                %s275 = ssub.s32 16, 1
                loop: start=0, step=1, limit=1
                $region59: #{fame_forward.5} parent=50 // loop_pre_header
                  _
                $region60: #{fame_forward.5} parent=50 // loop_header
                  %s277 = sphi 0, %s281
                  %p278 = scmp.ge.s32.totalorder %s277, 1
                  %s282 = sphi %s215, %s215
                  %s283 = sphi %s210, %s210
                $region61: #{fame_forward.5} parent=50 // loop_header_branch
                  %280 = sbr.rel (%p278) target = $region65
                $region62: #{fame_forward.5} parent=50 // loop_body
                  %v284 = vld [vmem:[%s282] sm:%s275]
                  %285 = vst [vmem:[%s283] sm:%s275] %v284
                  %v286 = vld [vmem:[%s282 + $0xc] sm:%s275]
                  %287 = vst [vmem:[%s283 + $0x4] sm:%s275] %v286
                  %v288 = vld [vmem:[%s282 + $0x18] sm:%s275]
                  %289 = vst [vmem:[%s283 + $0x8] sm:%s275] %v288
                  %v290 = vld [vmem:[%s282 + $0x24] sm:%s275]
                  %291 = vst [vmem:[%s283 + $0xc] sm:%s275] %v290
                  %v292 = vld [vmem:[%s282 + $0x30] sm:%s275]
                  %293 = vst [vmem:[%s283 + $0x10] sm:%s275] %v292
                  %v294 = vld [vmem:[%s282 + $0x3c] sm:%s275]
                  %295 = vst [vmem:[%s283 + $0x14] sm:%s275] %v294
                  %v296 = vld [vmem:[%s282 + $0x48] sm:%s275]
                  %297 = vst [vmem:[%s283 + $0x18] sm:%s275] %v296
                  %v298 = vld [vmem:[%s282 + $0x54] sm:%s275]
                  %299 = vst [vmem:[%s283 + $0x1c] sm:%s275] %v298
                  %v300 = vld [vmem:[%s282 + $0x60] sm:%s275]
                  %301 = vst [vmem:[%s283 + $0x20] sm:%s275] %v300
                  %v302 = vld [vmem:[%s282 + $0x6c] sm:%s275]
                  %303 = vst [vmem:[%s283 + $0x24] sm:%s275] %v302
                  %v304 = vld [vmem:[%s282 + $0x78] sm:%s275]
                  %305 = vst [vmem:[%s283 + $0x28] sm:%s275] %v304
                  %v306 = vld [vmem:[%s282 + $0x84] sm:%s275]
                  %307 = vst [vmem:[%s283 + $0x2c] sm:%s275] %v306
                  %v308 = vld [vmem:[%s282 + $0x90] sm:%s275]
                  %309 = vst [vmem:[%s283 + $0x30] sm:%s275] %v308
                  %v310 = vld [vmem:[%s282 + $0x9c] sm:%s275]
                  %311 = vst [vmem:[%s283 + $0x34] sm:%s275] %v310
                  %v312 = vld [vmem:[%s282 + $0xa8] sm:%s275]
                  %313 = vst [vmem:[%s283 + $0x38] sm:%s275] %v312
                  %v314 = vld [vmem:[%s282 + $0xb4] sm:%s275]
                  %315 = vst [vmem:[%s283 + $0x3c] sm:%s275] %v314
                $region63: #{fame_forward.5} parent=50 // loop_footer
                  %s281 = sadd.s32 1, %s277
                $region64: #{fame_forward.5} parent=50 // loop_footer_branch
                  %276 = sbr.rel target = $region60
                $region65: #{fame_forward.5} parent=50 // loop_exit
                  _
              $region51: #{fame_forward.5} parent=35 // pred_fallthru
                _
            $region36: #{fame_forward.5} parent=31 // pred_fallthru
              _
            // Predicated region
            $region37: #{fame_forward.5} parent=31 // pred_check
              _
            $region38: #{fame_forward.5} parent=31 // pred_check_branch
              %221 = sbr.rel (0) target = $region40
            $region39: #{fame_forward.5} parent=31 // pred_region
              %s223 = ssub.s32 16, 1
              loop: start=0, step=1, limit=1
              $region41: #{fame_forward.5} parent=39 // loop_pre_header
                _
              $region42: #{fame_forward.5} parent=39 // loop_header
                %s225 = sphi 0, %s229
                %p226 = scmp.ge.s32.totalorder %s225, 1
                %s230 = sphi %s215, %s215
                %s231 = sphi %s210, %s210
              $region43: #{fame_forward.5} parent=39 // loop_header_branch
                %228 = sbr.rel (%p226) target = $region47
              $region44: #{fame_forward.5} parent=39 // loop_body
                %v232 = vld [vmem:[%s230] sm:%s223]
                %233 = vst [vmem:[%s231] sm:%s223] %v232
                %v234 = vld [vmem:[%s230 + $0xc] sm:%s223]
                %235 = vst [vmem:[%s231 + $0x4] sm:%s223] %v234
                %v236 = vld [vmem:[%s230 + $0x18] sm:%s223]
                %237 = vst [vmem:[%s231 + $0x8] sm:%s223] %v236
                %v238 = vld [vmem:[%s230 + $0x24] sm:%s223]
                %239 = vst [vmem:[%s231 + $0xc] sm:%s223] %v238
                %v240 = vld [vmem:[%s230 + $0x30] sm:%s223]
                %241 = vst [vmem:[%s231 + $0x10] sm:%s223] %v240
                %v242 = vld [vmem:[%s230 + $0x3c] sm:%s223]
                %243 = vst [vmem:[%s231 + $0x14] sm:%s223] %v242
                %v244 = vld [vmem:[%s230 + $0x48] sm:%s223]
                %245 = vst [vmem:[%s231 + $0x18] sm:%s223] %v244
                %v246 = vld [vmem:[%s230 + $0x54] sm:%s223]
                %247 = vst [vmem:[%s231 + $0x1c] sm:%s223] %v246
                %v248 = vld [vmem:[%s230 + $0x60] sm:%s223]
                %249 = vst [vmem:[%s231 + $0x20] sm:%s223] %v248
                %v250 = vld [vmem:[%s230 + $0x6c] sm:%s223]
                %251 = vst [vmem:[%s231 + $0x24] sm:%s223] %v250
                %v252 = vld [vmem:[%s230 + $0x78] sm:%s223]
                %253 = vst [vmem:[%s231 + $0x28] sm:%s223] %v252
                %v254 = vld [vmem:[%s230 + $0x84] sm:%s223]
                %255 = vst [vmem:[%s231 + $0x2c] sm:%s223] %v254
                %v256 = vld [vmem:[%s230 + $0x90] sm:%s223]
                %257 = vst [vmem:[%s231 + $0x30] sm:%s223] %v256
                %v258 = vld [vmem:[%s230 + $0x9c] sm:%s223]
                %259 = vst [vmem:[%s231 + $0x34] sm:%s223] %v258
                %v260 = vld [vmem:[%s230 + $0xa8] sm:%s223]
                %261 = vst [vmem:[%s231 + $0x38] sm:%s223] %v260
                %v262 = vld [vmem:[%s230 + $0xb4] sm:%s223]
                %263 = vst [vmem:[%s231 + $0x3c] sm:%s223] %v262
              $region45: #{fame_forward.5} parent=39 // loop_footer
                %s229 = sadd.s32 1, %s225
              $region46: #{fame_forward.5} parent=39 // loop_footer_branch
                %224 = sbr.rel target = $region42
              $region47: #{fame_forward.5} parent=39 // loop_exit
                _
            $region40: #{fame_forward.5} parent=31 // pred_fallthru
              _
          $region32: #{fame_forward.5} parent=27 // pred_fallthru
            _
          %316 = vnop
        $region28: #{fame_forward.5} parent=23 // pred_fallthru
          _
        // Predicated region
        $region66: #{fame_forward.5} parent=23 // pred_check
          %p317 = pneg %p114
        $region67: #{fame_forward.5} parent=23 // pred_check_branch
          %319 = sbr.rel (%p317) target = $region69
        $region68: #{fame_forward.5} parent=23 // pred_region
          %s320 = smul.u32 16, %s19
          %p321 = scmp.lt.s32.totalorder %s320, 47
          %s322 = scalar_select %p321, %s320, 47
          %s323 = smul.addr %s322, 8
          %s324 = scalar_lea.vmem %s3, %s323
          %s325 = smul.u32 16, %s19
        $region69: #{fame_forward.5} parent=23 // pred_fallthru
          _
        // Predicated region
        $region70: #{fame_forward.5} parent=23 // pred_check
          %p326 = pneg %p140
        $region71: #{fame_forward.5} parent=23 // pred_check_branch
          %328 = sbr.rel (%p326) target = $region73
        $region72: #{fame_forward.5} parent=23 // pred_region
          %s329 = smul.u32 16, %s19
          %p330 = scmp.lt.s32.totalorder %s329, 47
          %s331 = scalar_select %p330, %s329, 47
          %s332 = smul.addr %s331, 8
          %s333 = scalar_lea.vmem %s4, %s332
          %s334 = smul.u32 16, %s19
        $region73: #{fame_forward.5} parent=23 // pred_fallthru
          _
      $region24: #{fame_forward.5} parent=5 // pred_fallthru
        _
      %p335 = scmp.le.s32.totalorder 1, %s12
      %p336 = scmp.lt.s32.totalorder %s12, 10
      %p337 = pnand %p335, %p336
      %p338 = pneg %p337
      // Predicated region
      $region74: #{fame_forward.5} parent=5 // pred_check
        _
      $region75: #{fame_forward.5} parent=5 // pred_check_branch
        %340 = sbr.rel (%p337) target = $region77
      $region76: #{fame_forward.5} parent=5 // pred_region
        %s341 = ssub.s32 %s12, 1
        // Predicated region
        $region78: #{fame_forward.5} parent=76 // pred_check
          %p342 = pneg %p45
        $region79: #{fame_forward.5} parent=76 // pred_check_branch
          %344 = sbr.rel (%p342) target = $region81
        $region80: #{fame_forward.5} parent=76 // pred_region
          %346 = dma.done [#allocation4], 16
        $region81: #{fame_forward.5} parent=76 // pred_fallthru
          _
        %s347 = sand.u32 %s60, 1
        %s348 = sand.u32 %s60, 1
        %s349 = smul.addr %s348, 64
        %s350 = scalar_lea.vmem [#allocation5], %s349
        // Predicated region
        $region82: #{fame_forward.5} parent=76 // pred_check
          %p351 = pneg %p73
        $region83: #{fame_forward.5} parent=76 // pred_check_branch
          %353 = sbr.rel (%p351) target = $region85
        $region84: #{fame_forward.5} parent=76 // pred_region
          _
        $region85: #{fame_forward.5} parent=76 // pred_fallthru
          _
        %354 = sfence
        %p355 = pneg %p45
        %p356 = pneg %p42
        %s357 = sand.u32 %s60, 1
        %s358 = sand.u32 %s60, 1
        %s359 = smul.addr %s358, 64
        %s360 = scalar_lea.vmem [#allocation5], %s359
        %p361 = pneg %p73
        %p362 = pneg %p70
        %p363 = pneg %p94
        %p364 = pneg %p91
        %s365 = smul.u32 16, %s21
        %p366 = scmp.lt.s32.totalorder %s365, 47
        %s367 = scalar_select %p366, %s365, 47
        %s368 = smul.addr %s367, 8
        %s369 = scalar_lea.vmem %s3, %s368
        %p370 = pneg %p120
        %p371 = pneg %p117
        %s372 = smul.u32 16, %s21
        %p373 = scmp.lt.s32.totalorder %s372, 47
        %s374 = scalar_select %p373, %s372, 47
        %s375 = smul.addr %s374, 8
        %s376 = scalar_lea.vmem %s4, %s375
        %p377 = pneg %p146
        %p378 = pneg %p143
        %p379 = pneg %p172
        %p380 = pneg %p169
        %s381 = smul.u32 16, %s21
        %p382 = scmp.lt.s32.totalorder %s381, 47
        %s383 = scalar_select %p382, %s381, 47
        %s384 = smul.addr %s383, 8
        %s385 = scalar_lea.vmem %s5, %s384
        %s386 = smul.u32 16, %s21
        %s387 = smul.u32 16, %s21
        %p388 = scmp.lt.s32.totalorder %s387, 47
        %s389 = scalar_select %p388, %s387, 47
        %s390 = smul.addr %s389, 8
        %s391 = scalar_lea.vmem %s3, %s390
        %s392 = smul.u32 16, %s21
        %s393 = smul.u32 16, %s21
        %p394 = scmp.lt.s32.totalorder %s393, 47
        %s395 = scalar_select %p394, %s393, 47
        %s396 = smul.addr %s395, 8
        %s397 = scalar_lea.vmem %s4, %s396
        %s398 = smul.u32 16, %s21
        %s399 = smul.u32 16, %s21
        %p400 = scmp.lt.s32.totalorder %s399, 47
        %s401 = scalar_select %p400, %s399, 47
        %s402 = smul.addr %s401, 8
        %s403 = scalar_lea.vmem %s5, %s402
        %s404 = smul.u32 16, %s21
        %p405 = scmp.eq.s32.totalorder %s22, 0
        // Predicated region
        $region86: #{fame_forward.5} parent=76 // pred_check
          %p406 = pneg %p405
        $region87: #{fame_forward.5} parent=76 // pred_check_branch
          %408 = sbr.rel (%p406) target = $region89
        $region88: #{fame_forward.5} parent=76 // pred_region
          %409 = vst [vmem:[#allocation2] sm:$0xff] 0.0
          %410 = vst [vmem:[#allocation2 + $0x8] sm:$0xff] 0.0
          %411 = vst [vmem:[#allocation2 + $0x10] sm:$0xff] 0.0
          %412 = vst [vmem:[#allocation2 + $0x18] sm:$0xff] 0.0
          %413 = vst [vmem:[#allocation2 + $0x20] sm:$0xff] 0.0
          %414 = vst [vmem:[#allocation2 + $0x28] sm:$0xff] 0.0
          %415 = vst [vmem:[#allocation2 + $0x30] sm:$0xff] 0.0
          %416 = vst [vmem:[#allocation2 + $0x38] sm:$0xff] 0.0
          %417 = vst [vmem:[#allocation2 + $0x40] sm:$0xff] 0.0
          %418 = vst [vmem:[#allocation2 + $0x48] sm:$0xff] 0.0
          %419 = vst [vmem:[#allocation2 + $0x50] sm:$0xff] 0.0
          %420 = vst [vmem:[#allocation2 + $0x58] sm:$0xff] 0.0
          %421 = vst [vmem:[#allocation2 + $0x60] sm:$0xff] 0.0
          %422 = vst [vmem:[#allocation2 + $0x68] sm:$0xff] 0.0
          %423 = vst [vmem:[#allocation2 + $0x70] sm:$0xff] 0.0
          %424 = vst [vmem:[#allocation2 + $0x78] sm:$0xff] 0.0
        $region89: #{fame_forward.5} parent=76 // pred_fallthru
          _
        %s425 = smul.u32 %s22, 128
        %v426 = vld [vmem:[#allocation2] sm:$0xff]
        %v427 = vld [vmem:[#allocation2 + $0x8] sm:$0xff]
        %v428 = vld [vmem:[#allocation2 + $0x10] sm:$0xff]
        %v429 = vld [vmem:[#allocation2 + $0x18] sm:$0xff]
        %v430 = vld [vmem:[#allocation2 + $0x20] sm:$0xff]
        %v431 = vld [vmem:[#allocation2 + $0x28] sm:$0xff]
        %v432 = vld [vmem:[#allocation2 + $0x30] sm:$0xff]
        %v433 = vld [vmem:[#allocation2 + $0x38] sm:$0xff]
        %v434 = vld [vmem:[#allocation2 + $0x40] sm:$0xff]
        %v435 = vld [vmem:[#allocation2 + $0x48] sm:$0xff]
        %v436 = vld [vmem:[#allocation2 + $0x50] sm:$0xff]
        %v437 = vld [vmem:[#allocation2 + $0x58] sm:$0xff]
        %v438 = vld [vmem:[#allocation2 + $0x60] sm:$0xff]
        %v439 = vld [vmem:[#allocation2 + $0x68] sm:$0xff]
        %v440 = vld [vmem:[#allocation2 + $0x70] sm:$0xff]
        %v441 = vld [vmem:[#allocation2 + $0x78] sm:$0xff]
        %v442 = vld [vmem:[%s350] sm:$0xf]
        %v443 = vld [vmem:[%s350 + $0x4] sm:$0xf]
        %v444 = vld [vmem:[%s350 + $0x8] sm:$0xf]
        %v445 = vld [vmem:[%s350 + $0xc] sm:$0xf]
        %v446 = vld [vmem:[%s350 + $0x10] sm:$0xf]
        %v447 = vld [vmem:[%s350 + $0x14] sm:$0xf]
        %v448 = vld [vmem:[%s350 + $0x18] sm:$0xf]
        %v449 = vld [vmem:[%s350 + $0x1c] sm:$0xf]
        %v450 = vld [vmem:[%s350 + $0x20] sm:$0xf]
        %v451 = vld [vmem:[%s350 + $0x24] sm:$0xf]
        %v452 = vld [vmem:[%s350 + $0x28] sm:$0xf]
        %v453 = vld [vmem:[%s350 + $0x2c] sm:$0xf]
        %v454 = vld [vmem:[%s350 + $0x30] sm:$0xf]
        %v455 = vld [vmem:[%s350 + $0x34] sm:$0xf]
        %v456 = vld [vmem:[%s350 + $0x38] sm:$0xf]
        %v457 = vld [vmem:[%s350 + $0x3c] sm:$0xf]
        %s458 = sshra.s32 %s425, 3
        %s459 = sand.u32 %s425, 7
        %s460 = smul.addr %s458, 4
        %s461 = scalar_lea.vmem %s2, %s460
        %v462 = vld [vmem:[%s461] sm:$0xf]
        %v463 = vld [vmem:[%s461 + $0x4] sm:$0xf]
        %v464 = vld [vmem:[%s461 + $0x8] sm:$0xf]
        %v465 = vld [vmem:[%s461 + $0xc] sm:$0xf]
        %v466 = vld [vmem:[%s461 + $0x10] sm:$0xf]
        %v467 = vld [vmem:[%s461 + $0x14] sm:$0xf]
        %v468 = vld [vmem:[%s461 + $0x18] sm:$0xf]
        %v469 = vld [vmem:[%s461 + $0x1c] sm:$0xf]
        %v470 = vld [vmem:[%s461 + $0x20] sm:$0xf]
        %v471 = vld [vmem:[%s461 + $0x24] sm:$0xf]
        %v472 = vld [vmem:[%s461 + $0x28] sm:$0xf]
        %v473 = vld [vmem:[%s461 + $0x2c] sm:$0xf]
        %v474 = vld [vmem:[%s461 + $0x30] sm:$0xf]
        %v475 = vld [vmem:[%s461 + $0x34] sm:$0xf]
        %v476 = vld [vmem:[%s461 + $0x38] sm:$0xf]
        %v477 = vld [vmem:[%s461 + $0x3c] sm:$0xf]
        %v494 = vunpack.c.l.b16 %v442
        %v495 = vunpack.c.l.b16 %v443
        %v496 = vunpack.c.l.b16 %v444
        %v497 = vunpack.c.l.b16 %v445
        %v498 = vunpack.c.l.b16 %v446
        %v499 = vunpack.c.l.b16 %v447
        %v500 = vunpack.c.l.b16 %v448
        %v501 = vunpack.c.l.b16 %v449
        %v502 = vunpack.c.l.b16 %v450
        %v503 = vunpack.c.l.b16 %v451
        %v504 = vunpack.c.l.b16 %v452
        %v505 = vunpack.c.l.b16 %v453
        %v506 = vunpack.c.l.b16 %v454
        %v507 = vunpack.c.l.b16 %v455
        %v508 = vunpack.c.l.b16 %v456
        %v509 = vunpack.c.l.b16 %v457
        %v510 = vpack.c.b16 %v495, %v494
        %v511 = vpack.c.b16 %v497, %v496
        %v512 = vpack.c.b16 %v499, %v498
        %v513 = vpack.c.b16 %v501, %v500
        %v514 = vpack.c.b16 %v503, %v502
        %v515 = vpack.c.b16 %v505, %v504
        %v516 = vpack.c.b16 %v507, %v506
        %v517 = vpack.c.b16 %v509, %v508
        %v542 = vunpack.c.l.b16 %v462
        %v543 = vunpack.c.l.b16 %v463
        %v544 = vunpack.c.l.b16 %v464
        %v545 = vunpack.c.l.b16 %v465
        %v546 = vunpack.c.l.b16 %v466
        %v547 = vunpack.c.l.b16 %v467
        %v548 = vunpack.c.l.b16 %v468
        %v549 = vunpack.c.l.b16 %v469
        %v550 = vunpack.c.l.b16 %v470
        %v551 = vunpack.c.l.b16 %v471
        %v552 = vunpack.c.l.b16 %v472
        %v553 = vunpack.c.l.b16 %v473
        %v554 = vunpack.c.l.b16 %v474
        %v555 = vunpack.c.l.b16 %v475
        %v556 = vunpack.c.l.b16 %v476
        %v557 = vunpack.c.l.b16 %v477
        %v558 = vpack.c.b16 %v543, %v542
        %v559 = vpack.c.b16 %v545, %v544
        %v560 = vpack.c.b16 %v547, %v546
        %v561 = vpack.c.b16 %v549, %v548
        %v562 = vpack.c.b16 %v551, %v550
        %v563 = vpack.c.b16 %v553, %v552
        %v564 = vpack.c.b16 %v555, %v554
        %v565 = vpack.c.b16 %v557, %v556
        %574 = vmatpush.bf16.msra.mxu0 %v565
        %575 = vmatpush.bf16.msra.mxu0 %v564
        %576 = vmatpush.bf16.msra.mxu0 %v563
        %577 = vmatpush.bf16.msra.mxu0 %v562
        %578 = vmatpush.bf16.msra.mxu0 %v561
        %579 = vmatpush.bf16.msra.mxu0 %v560
        %580 = vmatpush.bf16.msra.mxu0 %v559
        %581 = vmatpush.bf16.msra.mxu0 %v558
        %582 = vmatmul.bf16.gmra.mxu0 %v510
        %v583 = vpop.f32.mrf.mxu0
        %v584 = vadd.f32 0.0, %v583
        %v585 = vpop.f32.mrf.mxu0
        %v586 = vadd.f32 0.0, %v585
        %587 = vmatmul.bf16.gmra.mxu0 %v511
        %v588 = vpop.f32.mrf.mxu0
        %v589 = vadd.f32 0.0, %v588
        %v590 = vpop.f32.mrf.mxu0
        %v591 = vadd.f32 0.0, %v590
        %592 = vmatmul.bf16.gmra.mxu0 %v512
        %v593 = vpop.f32.mrf.mxu0
        %v594 = vadd.f32 0.0, %v593
        %v595 = vpop.f32.mrf.mxu0
        %v596 = vadd.f32 0.0, %v595
        %597 = vmatmul.bf16.gmra.mxu0 %v513
        %v598 = vpop.f32.mrf.mxu0
        %v599 = vadd.f32 0.0, %v598
        %v600 = vpop.f32.mrf.mxu0
        %v601 = vadd.f32 0.0, %v600
        %602 = vmatmul.bf16.gmra.mxu0 %v514
        %v603 = vpop.f32.mrf.mxu0
        %v604 = vadd.f32 0.0, %v603
        %v605 = vpop.f32.mrf.mxu0
        %v606 = vadd.f32 0.0, %v605
        %607 = vmatmul.bf16.gmra.mxu0 %v515
        %v608 = vpop.f32.mrf.mxu0
        %v609 = vadd.f32 0.0, %v608
        %v610 = vpop.f32.mrf.mxu0
        %v611 = vadd.f32 0.0, %v610
        %612 = vmatmul.bf16.gmra.mxu0 %v516
        %v613 = vpop.f32.mrf.mxu0
        %v614 = vadd.f32 0.0, %v613
        %v615 = vpop.f32.mrf.mxu0
        %v616 = vadd.f32 0.0, %v615
        %617 = vmatmul.bf16.gmra.mxu0 %v517
        %v618 = vpop.f32.mrf.mxu0
        %v619 = vadd.f32 0.0, %v618
        %v620 = vpop.f32.mrf.mxu0
        %v621 = vadd.f32 0.0, %v620
        %622 = vdwg.mxu0
        %v623 = vadd.f32 %v426, %v584
        %v624 = vadd.f32 %v427, %v586
        %v625 = vadd.f32 %v428, %v589
        %v626 = vadd.f32 %v429, %v591
        %v627 = vadd.f32 %v430, %v594
        %v628 = vadd.f32 %v431, %v596
        %v629 = vadd.f32 %v432, %v599
        %v630 = vadd.f32 %v433, %v601
        %v631 = vadd.f32 %v434, %v604
        %v632 = vadd.f32 %v435, %v606
        %v633 = vadd.f32 %v436, %v609
        %v634 = vadd.f32 %v437, %v611
        %v635 = vadd.f32 %v438, %v614
        %v636 = vadd.f32 %v439, %v616
        %v637 = vadd.f32 %v440, %v619
        %v638 = vadd.f32 %v441, %v621
        %639 = vst [vmem:[#allocation2] sm:$0xff] %v623
        %640 = vst [vmem:[#allocation2 + $0x8] sm:$0xff] %v624
        %641 = vst [vmem:[#allocation2 + $0x10] sm:$0xff] %v625
        %642 = vst [vmem:[#allocation2 + $0x18] sm:$0xff] %v626
        %643 = vst [vmem:[#allocation2 + $0x20] sm:$0xff] %v627
        %644 = vst [vmem:[#allocation2 + $0x28] sm:$0xff] %v628
        %645 = vst [vmem:[#allocation2 + $0x30] sm:$0xff] %v629
        %646 = vst [vmem:[#allocation2 + $0x38] sm:$0xff] %v630
        %647 = vst [vmem:[#allocation2 + $0x40] sm:$0xff] %v631
        %648 = vst [vmem:[#allocation2 + $0x48] sm:$0xff] %v632
        %649 = vst [vmem:[#allocation2 + $0x50] sm:$0xff] %v633
        %650 = vst [vmem:[#allocation2 + $0x58] sm:$0xff] %v634
        %651 = vst [vmem:[#allocation2 + $0x60] sm:$0xff] %v635
        %652 = vst [vmem:[#allocation2 + $0x68] sm:$0xff] %v636
        %653 = vst [vmem:[#allocation2 + $0x70] sm:$0xff] %v637
        %654 = vst [vmem:[#allocation2 + $0x78] sm:$0xff] %v638
        %p655 = scmp.eq.s32.totalorder %s22, 2
        // Predicated region
        $region90: #{fame_forward.5} parent=76 // pred_check
          %p656 = pneg %p655
        $region91: #{fame_forward.5} parent=76 // pred_check_branch
          %658 = sbr.rel (%p656) target = $region93
        $region92: #{fame_forward.5} parent=76 // pred_region
          %s659 = sld [smem:[#allocation3]]
          %v660 = vld [vmem:[%s391] sm:$0xff]
          %v661 = vld [vmem:[%s391 + $0x8] sm:$0xff]
          %v662 = vld [vmem:[%s391 + $0x10] sm:$0xff]
          %v663 = vld [vmem:[%s391 + $0x18] sm:$0xff]
          %v664 = vld [vmem:[%s391 + $0x20] sm:$0xff]
          %v665 = vld [vmem:[%s391 + $0x28] sm:$0xff]
          %v666 = vld [vmem:[%s391 + $0x30] sm:$0xff]
          %v667 = vld [vmem:[%s391 + $0x38] sm:$0xff]
          %v668 = vld [vmem:[%s391 + $0x40] sm:$0xff]
          %v669 = vld [vmem:[%s391 + $0x48] sm:$0xff]
          %v670 = vld [vmem:[%s391 + $0x50] sm:$0xff]
          %v671 = vld [vmem:[%s391 + $0x58] sm:$0xff]
          %v672 = vld [vmem:[%s391 + $0x60] sm:$0xff]
          %v673 = vld [vmem:[%s391 + $0x68] sm:$0xff]
          %v674 = vld [vmem:[%s391 + $0x70] sm:$0xff]
          %v675 = vld [vmem:[%s391 + $0x78] sm:$0xff]
          %v676 = vstv %s659
          %v677 = vmul.f32 %v676, %v660
          %v678 = vmul.f32 %v676, %v661
          %v679 = vmul.f32 %v676, %v662
          %v680 = vmul.f32 %v676, %v663
          %v681 = vmul.f32 %v676, %v664
          %v682 = vmul.f32 %v676, %v665
          %v683 = vmul.f32 %v676, %v666
          %v684 = vmul.f32 %v676, %v667
          %v685 = vmul.f32 %v676, %v668
          %v686 = vmul.f32 %v676, %v669
          %v687 = vmul.f32 %v676, %v670
          %v688 = vmul.f32 %v676, %v671
          %v689 = vmul.f32 %v676, %v672
          %v690 = vmul.f32 %v676, %v673
          %v691 = vmul.f32 %v676, %v674
          %v692 = vmul.f32 %v676, %v675
          %s693 = sld [smem:[#allocation3 + $0x1]]
          %v694 = vld [vmem:[%s397] sm:$0xff]
          %v695 = vld [vmem:[%s397 + $0x8] sm:$0xff]
          %v696 = vld [vmem:[%s397 + $0x10] sm:$0xff]
          %v697 = vld [vmem:[%s397 + $0x18] sm:$0xff]
          %v698 = vld [vmem:[%s397 + $0x20] sm:$0xff]
          %v699 = vld [vmem:[%s397 + $0x28] sm:$0xff]
          %v700 = vld [vmem:[%s397 + $0x30] sm:$0xff]
          %v701 = vld [vmem:[%s397 + $0x38] sm:$0xff]
          %v702 = vld [vmem:[%s397 + $0x40] sm:$0xff]
          %v703 = vld [vmem:[%s397 + $0x48] sm:$0xff]
          %v704 = vld [vmem:[%s397 + $0x50] sm:$0xff]
          %v705 = vld [vmem:[%s397 + $0x58] sm:$0xff]
          %v706 = vld [vmem:[%s397 + $0x60] sm:$0xff]
          %v707 = vld [vmem:[%s397 + $0x68] sm:$0xff]
          %v708 = vld [vmem:[%s397 + $0x70] sm:$0xff]
          %v709 = vld [vmem:[%s397 + $0x78] sm:$0xff]
          %v710 = vstv %s693
          %v711 = vmul.f32 %v710, %v694
          %v712 = vmul.f32 %v710, %v695
          %v713 = vmul.f32 %v710, %v696
          %v714 = vmul.f32 %v710, %v697
          %v715 = vmul.f32 %v710, %v698
          %v716 = vmul.f32 %v710, %v699
          %v717 = vmul.f32 %v710, %v700
          %v718 = vmul.f32 %v710, %v701
          %v719 = vmul.f32 %v710, %v702
          %v720 = vmul.f32 %v710, %v703
          %v721 = vmul.f32 %v710, %v704
          %v722 = vmul.f32 %v710, %v705
          %v723 = vmul.f32 %v710, %v706
          %v724 = vmul.f32 %v710, %v707
          %v725 = vmul.f32 %v710, %v708
          %v726 = vmul.f32 %v710, %v709
          %v727 = vadd.f32 %v677, %v711
          %v728 = vadd.f32 %v678, %v712
          %v729 = vadd.f32 %v679, %v713
          %v730 = vadd.f32 %v680, %v714
          %v731 = vadd.f32 %v681, %v715
          %v732 = vadd.f32 %v682, %v716
          %v733 = vadd.f32 %v683, %v717
          %v734 = vadd.f32 %v684, %v718
          %v735 = vadd.f32 %v685, %v719
          %v736 = vadd.f32 %v686, %v720
          %v737 = vadd.f32 %v687, %v721
          %v738 = vadd.f32 %v688, %v722
          %v739 = vadd.f32 %v689, %v723
          %v740 = vadd.f32 %v690, %v724
          %v741 = vadd.f32 %v691, %v725
          %v742 = vadd.f32 %v692, %v726
          %s743 = sld [smem:[#allocation3 + $0x2]]
          %v744 = vld [vmem:[#allocation2] sm:$0xff]
          %v745 = vld [vmem:[#allocation2 + $0x8] sm:$0xff]
          %v746 = vld [vmem:[#allocation2 + $0x10] sm:$0xff]
          %v747 = vld [vmem:[#allocation2 + $0x18] sm:$0xff]
          %v748 = vld [vmem:[#allocation2 + $0x20] sm:$0xff]
          %v749 = vld [vmem:[#allocation2 + $0x28] sm:$0xff]
          %v750 = vld [vmem:[#allocation2 + $0x30] sm:$0xff]
          %v751 = vld [vmem:[#allocation2 + $0x38] sm:$0xff]
          %v752 = vld [vmem:[#allocation2 + $0x40] sm:$0xff]
          %v753 = vld [vmem:[#allocation2 + $0x48] sm:$0xff]
          %v754 = vld [vmem:[#allocation2 + $0x50] sm:$0xff]
          %v755 = vld [vmem:[#allocation2 + $0x58] sm:$0xff]
          %v756 = vld [vmem:[#allocation2 + $0x60] sm:$0xff]
          %v757 = vld [vmem:[#allocation2 + $0x68] sm:$0xff]
          %v758 = vld [vmem:[#allocation2 + $0x70] sm:$0xff]
          %v759 = vld [vmem:[#allocation2 + $0x78] sm:$0xff]
          %v760 = vstv %s743
          %v761 = vmul.f32 %v760, %v744
          %v762 = vmul.f32 %v760, %v745
          %v763 = vmul.f32 %v760, %v746
          %v764 = vmul.f32 %v760, %v747
          %v765 = vmul.f32 %v760, %v748
          %v766 = vmul.f32 %v760, %v749
          %v767 = vmul.f32 %v760, %v750
          %v768 = vmul.f32 %v760, %v751
          %v769 = vmul.f32 %v760, %v752
          %v770 = vmul.f32 %v760, %v753
          %v771 = vmul.f32 %v760, %v754
          %v772 = vmul.f32 %v760, %v755
          %v773 = vmul.f32 %v760, %v756
          %v774 = vmul.f32 %v760, %v757
          %v775 = vmul.f32 %v760, %v758
          %v776 = vmul.f32 %v760, %v759
          %v777 = vadd.f32 %v727, %v761
          %v778 = vadd.f32 %v728, %v762
          %v779 = vadd.f32 %v729, %v763
          %v780 = vadd.f32 %v730, %v764
          %v781 = vadd.f32 %v731, %v765
          %v782 = vadd.f32 %v732, %v766
          %v783 = vadd.f32 %v733, %v767
          %v784 = vadd.f32 %v734, %v768
          %v785 = vadd.f32 %v735, %v769
          %v786 = vadd.f32 %v736, %v770
          %v787 = vadd.f32 %v737, %v771
          %v788 = vadd.f32 %v738, %v772
          %v789 = vadd.f32 %v739, %v773
          %v790 = vadd.f32 %v740, %v774
          %v791 = vadd.f32 %v741, %v775
          %v792 = vadd.f32 %v742, %v776
          %793 = vst [vmem:[%s403] sm:$0xff] %v777
          %794 = vst [vmem:[%s403 + $0x8] sm:$0xff] %v778
          %795 = vst [vmem:[%s403 + $0x10] sm:$0xff] %v779
          %796 = vst [vmem:[%s403 + $0x18] sm:$0xff] %v780
          %797 = vst [vmem:[%s403 + $0x20] sm:$0xff] %v781
          %798 = vst [vmem:[%s403 + $0x28] sm:$0xff] %v782
          %799 = vst [vmem:[%s403 + $0x30] sm:$0xff] %v783
          %800 = vst [vmem:[%s403 + $0x38] sm:$0xff] %v784
          %801 = vst [vmem:[%s403 + $0x40] sm:$0xff] %v785
          %802 = vst [vmem:[%s403 + $0x48] sm:$0xff] %v786
          %803 = vst [vmem:[%s403 + $0x50] sm:$0xff] %v787
          %804 = vst [vmem:[%s403 + $0x58] sm:$0xff] %v788
          %805 = vst [vmem:[%s403 + $0x60] sm:$0xff] %v789
          %806 = vst [vmem:[%s403 + $0x68] sm:$0xff] %v790
          %807 = vst [vmem:[%s403 + $0x70] sm:$0xff] %v791
          %808 = vst [vmem:[%s403 + $0x78] sm:$0xff] %v792
        $region93: #{fame_forward.5} parent=76 // pred_fallthru
          _
        %s809 = smul.u32 16, %s21
        %p810 = scmp.lt.s32.totalorder %s809, 47
        %s811 = scalar_select %p810, %s809, 47
        %s812 = smul.addr %s811, 8
        %s813 = scalar_lea.vmem %s5, %s812
        // Predicated region
        $region94: #{fame_forward.5} parent=76 // pred_check
          %p814 = pneg %p169
        $region95: #{fame_forward.5} parent=76 // pred_check_branch
          %816 = sbr.rel (%p814) target = $region97
        $region96: #{fame_forward.5} parent=76 // pred_region
          %s817 = smul.u32 16, %s21
        $region97: #{fame_forward.5} parent=76 // pred_fallthru
          _
      $region77: #{fame_forward.5} parent=5 // pred_fallthru
        _
      %p818 = scmp.le.s32.totalorder 2, %s12
      // Predicated region
      $region98: #{fame_forward.5} parent=5 // pred_check
        %p819 = pneg %p818
      $region99: #{fame_forward.5} parent=5 // pred_check_branch
        %821 = sbr.rel (%p819) target = $region101
      $region100: #{fame_forward.5} parent=5 // pred_region
        %s822 = ssub.s32 %s12, 2
        // Predicated region
        $region102: #{fame_forward.5} parent=100 // pred_check
          %p823 = pneg %p175
        $region103: #{fame_forward.5} parent=100 // pred_check_branch
          %825 = sbr.rel (%p823) target = $region105
        $region104: #{fame_forward.5} parent=100 // pred_region
          %s826 = smul.u32 16, %s23
          %p827 = scmp.lt.s32.totalorder %s826, 47
          %s828 = scalar_select %p827, %s826, 47
          %s829 = smul.addr %s828, 8
          %s830 = scalar_lea.vmem %s5, %s829
        $region105: #{fame_forward.5} parent=100 // pred_fallthru
          _
      $region101: #{fame_forward.5} parent=5 // pred_fallthru
        _
    $region6: #{fame_forward.5} parent=1 // loop_footer
      %s16 = sadd.s32 1, %s12
    $region7: #{fame_forward.5} parent=1 // loop_footer_branch
      %11 = sbr.rel target = $region3
    $region8: #{fame_forward.5} parent=1 // loop_exit
      _
    %831 = vsyncpa [#allocation4], 1
    %s832 = scalar_lea.sflag [#allocation4], 1
    %833 = vsyncpa %s832, 1

</llo_original>
